<compile_context>
chip_gen: v7x
topology: tpu7x:2x2x1
jax: 0.10.0
libtpu: 0.0.40
codegen_flags: <defaults>
</compile_context>

<pallas_src>
import functools
import math

import jax
import jax.numpy as jnp
from jax.experimental import pallas as pl
from jax.experimental.pallas import tpu as pltpu


# ------------------------------ Fused kernel --------------------------------

def _fused_mha_kernel(xq_ref, xk_ref, xv_ref, wq_ref, wk_ref, wv_ref, wo_ref,
                      o_ref, *, num_heads, head_dim, scale):
    """One grid step = one batch element: QKV proj + causal MHA + out proj."""
    xq = xq_ref[...]                       # (L, Dq)
    xk = xk_ref[...]                       # (S, Dk)
    xv = xv_ref[...]                       # (S, Dv)

    # Projections on the MXU; activations stay lane-dense (L, H*E) in VMEM.
    q = jnp.dot(xq, wq_ref[...], preferred_element_type=jnp.float32)  # (L, H*E)
    k = jnp.dot(xk, wk_ref[...], preferred_element_type=jnp.float32)  # (S, H*E)
    v = jnp.dot(xv, wv_ref[...], preferred_element_type=jnp.float32)  # (S, H*E)

    # Fold the softmax scale into q once (softmax(scale*(q.k)) == softmax((scale*q).k)).
    q = q * jnp.float32(scale)

    L = q.shape[0]
    S = k.shape[0]
    E = head_dim

    # Causal mask (TriangularCausalMask: strictly-upper triangle -> -inf),
    # hoisted once and reused by every head.
    row = jax.lax.broadcasted_iota(jnp.int32, (L, S), 0)
    col = jax.lax.broadcasted_iota(jnp.int32, (L, S), 1)
    causal = col > row
    neg_inf = jnp.float32(-jnp.inf)

    # Static (fully unrolled) loop over heads; slices are compile-time offsets
    # within a single 128-lane vreg, so they are cheap lane selects.
    ctx_parts = []
    for h in range(num_heads):
        lo = h * E
        qh = q[:, lo:lo + E]               # (L, E)
        kh = k[:, lo:lo + E]               # (S, E)
        vh = v[:, lo:lo + E]               # (S, E)

        # scores = q_h @ k_h^T without materializing a transpose:
        # contract last axis of q_h with last axis of k_h.
        s = jax.lax.dot_general(qh, kh, (((1,), (1,)), ((), ())),
                                preferred_element_type=jnp.float32)
        s = jnp.where(causal, neg_inf, s)

        # Numerically-stable softmax along the key axis.
        m = jnp.max(s, axis=-1, keepdims=True)
        p = jnp.exp(s - m)
        denom = jnp.sum(p, axis=-1, keepdims=True)
        a = p * pl.reciprocal(denom, approx=True)   # EUP vrcp (free slot)

        ctx_parts.append(jnp.dot(a, vh, preferred_element_type=jnp.float32))

    # Merge heads back to a lane-dense (L, H*E) slab, then output projection.
    ctx = jnp.concatenate(ctx_parts, axis=-1)                     # (L, H*E)
    out = jnp.dot(ctx, wo_ref[...], preferred_element_type=jnp.float32)
    o_ref[...] = out.astype(o_ref.dtype)                          # (L, num_hiddens)


# -------------------------------- Wrapper ------------------------------------

def masked_multi_head_attention(queries, keys, values, params, num_heads,
                                scale=None):
    """Forward pass matching MaskedMultiHeadAttention (eval mode)."""
    B, L, Dq = queries.shape
    _, S, Dk = keys.shape
    Dv = values.shape[2]
    assert keys.shape[0] == B and values.shape[0] == B
    assert values.shape[1] == S
    assert S == L, "TriangularCausalMask(B, L) requires key length == query length"

    num_hiddens = params["W_q"].shape[1]
    E = num_hiddens // num_heads
    scale = scale if scale is not None else 1.0 / math.sqrt(E)

    # Advisory cost estimate for the XLA scheduler.
    flops = (2 * B * L * (Dq + Dk + Dv) * num_hiddens          # projections
             + 4 * B * num_heads * L * S * E                   # scores + A@V
             + 2 * B * L * num_hiddens * num_hiddens)          # output proj
    transcendentals = B * num_heads * L * S                    # exp
    bytes_accessed = 4 * (B * L * (Dq + Dk + Dv)
                          + (Dq + Dk + Dv) * num_hiddens
                          + num_hiddens * num_hiddens
                          + B * L * num_hiddens)

    kernel = functools.partial(_fused_mha_kernel, num_heads=num_heads,
                               head_dim=E, scale=scale)

    return pl.pallas_call(
        kernel,
        out_shape=jax.ShapeDtypeStruct((B, L, num_hiddens), jnp.float32),
        grid=(B,),
        in_specs=[
            pl.BlockSpec((None, L, Dq), lambda b: (b, 0, 0)),
            pl.BlockSpec((None, S, Dk), lambda b: (b, 0, 0)),
            pl.BlockSpec((None, S, Dv), lambda b: (b, 0, 0)),
            pl.BlockSpec((Dq, num_hiddens), lambda b: (0, 0)),
            pl.BlockSpec((Dk, num_hiddens), lambda b: (0, 0)),
            pl.BlockSpec((Dv, num_hiddens), lambda b: (0, 0)),
            pl.BlockSpec((num_hiddens, num_hiddens), lambda b: (0, 0)),
        ],
        out_specs=pl.BlockSpec((None, L, num_hiddens), lambda b: (b, 0, 0)),
        compiler_params=pltpu.CompilerParams(
            dimension_semantics=("parallel",)),   # v7x: one batch per TensorCore
        cost_estimate=pl.CostEstimate(flops=flops,
                                      transcendentals=transcendentals,
                                      bytes_accessed=bytes_accessed),
    )(queries, keys, values,
      params["W_q"], params["W_k"], params["W_v"], params["W_o"])


# --------------------------- Pure-JAX reference ------------------------------

def _reference(queries, keys, values, params, num_heads, scale=None):
    B, L, _ = queries.shape
    S = keys.shape[1]
    num_hiddens = params["W_q"].shape[1]
    E = num_hiddens // num_heads
    scale = scale if scale is not None else 1.0 / math.sqrt(E)
    q = (queries @ params["W_q"]).reshape(B, L, num_heads, E)
    k = (keys @ params["W_k"]).reshape(B, S, num_heads, E)
    v = (values @ params["W_v"]).reshape(B, S, num_heads, E)
    scores = jnp.einsum("blhe,bshe->bhls", q, k)
    mask = jnp.triu(jnp.ones((L, S), dtype=bool), k=1)
    scores = jnp.where(mask[None, None], -jnp.inf, scores)
    a = jax.nn.softmax(scale * scores, axis=-1)
    out = jnp.einsum("bhls,bshd->blhd", a, v).reshape(B, L, num_hiddens)
    return out @ params["W_o"]


# ----------------------------------- Main ------------------------------------

if __name__ == "__main__":
    # Small shapes consistent with the module.
    B = 2          # batch
    L = 8          # sequence length (queries == keys == values length; causal)
    query_size = key_size = value_size = 16
    num_hiddens = 32
    num_heads = 4  # head dim E = 8

    key = jax.random.PRNGKey(0)
    kq, kk, kv, kwq, kwk, kwv, kwo = jax.random.split(key, 7)

    queries = jax.random.normal(kq, (B, L, query_size), dtype=jnp.float32)
    keys_in = jax.random.normal(kk, (B, L, key_size), dtype=jnp.float32)
    values_in = jax.random.normal(kv, (B, L, value_size), dtype=jnp.float32)

    # Weights stored as (in_features, out_features) so y = x @ W, matching
    # PyTorch's y = x @ weight.T.
    def init_w(k, fan_in, fan_out):
        bound = 1.0 / math.sqrt(fan_in)
        return jax.random.uniform(k, (fan_in, fan_out), jnp.float32,
                                  minval=-bound, maxval=bound)

    params = {
        "W_q": init_w(kwq, query_size, num_hiddens),
        "W_k": init_w(kwk, key_size, num_hiddens),
        "W_v": init_w(kwv, value_size, num_hiddens),
        "W_o": init_w(kwo, num_hiddens, num_hiddens),
    }

    out = masked_multi_head_attention(queries, keys_in, values_in, params,
                                      num_heads)
    out = jax.block_until_ready(out)

    ref = _reference(queries, keys_in, values_in, params, num_heads)
    assert out.shape == (B, L, num_hiddens)
    # Tolerance 2e-3: approx (EUP) reciprocal in the softmax normalizer is a
    # deliberate precision trade; outputs are O(1).
    assert jnp.allclose(out, ref, atol=2e-3, rtol=2e-3), "mismatch vs reference"

    print("KERNEL_OK")
</pallas_src>

<mosaic_0001>
module attributes {stable_mosaic.version = 11 : i64} {
  func.func @_fused_mha_kernel(%arg0: i32, %arg1: memref<1x8x16xf32, #tpu.memory_space<vmem>>, %arg2: memref<1x8x16xf32, #tpu.memory_space<vmem>>, %arg3: memref<1x8x16xf32, #tpu.memory_space<vmem>>, %arg4: memref<16x32xf32, #tpu.memory_space<vmem>>, %arg5: memref<16x32xf32, #tpu.memory_space<vmem>>, %arg6: memref<16x32xf32, #tpu.memory_space<vmem>>, %arg7: memref<32x32xf32, #tpu.memory_space<vmem>>, %arg8: memref<1x8x32xf32, #tpu.memory_space<vmem>>) attributes {dimension_semantics = [#tpu.dimension_semantics<parallel>], iteration_bounds = array<i64: 2>, scalar_prefetch = 0 : i64, scratch_operands = 0 : i64, tpu.core_type = #tpu.core_type<tc>, window_params = [{transform_indices = @transform_0, window_bounds = array<i64: 1, 8, 16>}, {transform_indices = @transform_1, window_bounds = array<i64: 1, 8, 16>}, {transform_indices = @transform_2, window_bounds = array<i64: 1, 8, 16>}, {pipeline_mode = #tpu.pipeline_mode<synchronous>, transform_indices = @transform_3, window_bounds = array<i64: 16, 32>}, {pipeline_mode = #tpu.pipeline_mode<synchronous>, transform_indices = @transform_4, window_bounds = array<i64: 16, 32>}, {pipeline_mode = #tpu.pipeline_mode<synchronous>, transform_indices = @transform_5, window_bounds = array<i64: 16, 32>}, {pipeline_mode = #tpu.pipeline_mode<synchronous>, transform_indices = @transform_6, window_bounds = array<i64: 32, 32>}, {transform_indices = @transform_7, window_bounds = array<i64: 1, 8, 32>}]} {
    %c0 = arith.constant 0 : index
    %c0_0 = arith.constant 0 : index
    %c0_1 = arith.constant 0 : index
    %0 = vector.load %arg1[%c0, %c0_0, %c0_1] : memref<1x8x16xf32, #tpu.memory_space<vmem>>, vector<1x8x16xf32>
    %1 = vector.shape_cast %0 : vector<1x8x16xf32> to vector<8x16xf32>
    %c0_2 = arith.constant 0 : index
    %c0_3 = arith.constant 0 : index
    %c0_4 = arith.constant 0 : index
    %2 = vector.load %arg2[%c0_2, %c0_3, %c0_4] : memref<1x8x16xf32, #tpu.memory_space<vmem>>, vector<1x8x16xf32>
    %3 = vector.shape_cast %2 : vector<1x8x16xf32> to vector<8x16xf32>
    %c0_5 = arith.constant 0 : index
    %c0_6 = arith.constant 0 : index
    %c0_7 = arith.constant 0 : index
    %4 = vector.load %arg3[%c0_5, %c0_6, %c0_7] : memref<1x8x16xf32, #tpu.memory_space<vmem>>, vector<1x8x16xf32>
    %5 = vector.shape_cast %4 : vector<1x8x16xf32> to vector<8x16xf32>
    %c0_8 = arith.constant 0 : index
    %c0_9 = arith.constant 0 : index
    %6 = vector.load %arg4[%c0_8, %c0_9] : memref<16x32xf32, #tpu.memory_space<vmem>>, vector<16x32xf32>
    %cst = arith.constant dense<0.000000e+00> : vector<8x32xf32>
    %7 = tpu.matmul %1, %6, %cst {dimension_numbers = #tpu.dot_dimension_numbers<[1], [0], [0], [1], [0, 0, 1, 1], [], []>} : vector<8x16xf32>, vector<16x32xf32>, vector<8x32xf32> -> vector<8x32xf32>
    %c0_10 = arith.constant 0 : index
    %c0_11 = arith.constant 0 : index
    %8 = vector.load %arg5[%c0_10, %c0_11] : memref<16x32xf32, #tpu.memory_space<vmem>>, vector<16x32xf32>
    %cst_12 = arith.constant dense<0.000000e+00> : vector<8x32xf32>
    %9 = tpu.matmul %3, %8, %cst_12 {dimension_numbers = #tpu.dot_dimension_numbers<[1], [0], [0], [1], [0, 0, 1, 1], [], []>} : vector<8x16xf32>, vector<16x32xf32>, vector<8x32xf32> -> vector<8x32xf32>
    %c0_13 = arith.constant 0 : index
    %c0_14 = arith.constant 0 : index
    %10 = vector.load %arg6[%c0_13, %c0_14] : memref<16x32xf32, #tpu.memory_space<vmem>>, vector<16x32xf32>
    %cst_15 = arith.constant dense<0.000000e+00> : vector<8x32xf32>
    %11 = tpu.matmul %5, %10, %cst_15 {dimension_numbers = #tpu.dot_dimension_numbers<[1], [0], [0], [1], [0, 0, 1, 1], [], []>} : vector<8x16xf32>, vector<16x32xf32>, vector<8x32xf32> -> vector<8x32xf32>
    %cst_16 = arith.constant 0.353553385 : f32
    %12 = vector.broadcast %cst_16 : f32 to vector<8x32xf32>
    %13 = arith.mulf %7, %12 : vector<8x32xf32>
    %14 = tpu.iota {dimensions = array<i32: 0>} : vector<8x8xi32>
    %15 = tpu.iota {dimensions = array<i32: 1>} : vector<8x8xi32>
    %16 = arith.cmpi sgt, %15, %14 : vector<8x8xi32>
    %17 = vector.extract_strided_slice %13 {offsets = [0, 0], sizes = [8, 8], strides = [1, 1]} : vector<8x32xf32> to vector<8x8xf32>
    %18 = vector.extract_strided_slice %9 {offsets = [0, 0], sizes = [8, 8], strides = [1, 1]} : vector<8x32xf32> to vector<8x8xf32>
    %19 = vector.extract_strided_slice %11 {offsets = [0, 0], sizes = [8, 8], strides = [1, 1]} : vector<8x32xf32> to vector<8x8xf32>
    %cst_17 = arith.constant dense<0.000000e+00> : vector<8x8xf32>
    %20 = tpu.matmul %17, %18, %cst_17 {dimension_numbers = #tpu.dot_dimension_numbers<[1], [1], [0], [0], [0, 0, 1, 0], [], []>} : vector<8x8xf32>, vector<8x8xf32>, vector<8x8xf32> -> vector<8x8xf32>
    %cst_18 = arith.constant 0xFF800000 : f32
    %21 = vector.broadcast %cst_18 : f32 to vector<8x8xf32>
    %22 = arith.select %16, %21, %20 : vector<8x8xi1>, vector<8x8xf32>
    %cst_19 = arith.constant dense<0xFF800000> : vector<8xf32>
    %23 = vector.multi_reduction <maximumf>, %22, %cst_19 [1] : vector<8x8xf32> to vector<8xf32>
    %24 = vector.shape_cast %23 : vector<8xf32> to vector<8x1xf32>
    %25 = vector.broadcast %24 : vector<8x1xf32> to vector<8x8xf32>
    %26 = arith.subf %22, %25 : vector<8x8xf32>
    %27 = math.exp %26 : vector<8x8xf32>
    %cst_20 = arith.constant dense<0.000000e+00> : vector<8xf32>
    %28 = vector.multi_reduction <add>, %27, %cst_20 [1] : vector<8x8xf32> to vector<8xf32>
    %29 = vector.shape_cast %28 : vector<8xf32> to vector<8x1xf32>
    %30 = tpu.reciprocal %29 {approx = true} : vector<8x1xf32> -> vector<8x1xf32>
    %31 = vector.broadcast %30 : vector<8x1xf32> to vector<8x8xf32>
    %32 = arith.mulf %27, %31 : vector<8x8xf32>
    %cst_21 = arith.constant dense<0.000000e+00> : vector<8x8xf32>
    %33 = tpu.matmul %32, %19, %cst_21 {dimension_numbers = #tpu.dot_dimension_numbers<[1], [0], [0], [1], [0, 0, 1, 1], [], []>} : vector<8x8xf32>, vector<8x8xf32>, vector<8x8xf32> -> vector<8x8xf32>
    %34 = vector.extract_strided_slice %13 {offsets = [0, 8], sizes = [8, 8], strides = [1, 1]} : vector<8x32xf32> to vector<8x8xf32>
    %35 = vector.extract_strided_slice %9 {offsets = [0, 8], sizes = [8, 8], strides = [1, 1]} : vector<8x32xf32> to vector<8x8xf32>
    %36 = vector.extract_strided_slice %11 {offsets = [0, 8], sizes = [8, 8], strides = [1, 1]} : vector<8x32xf32> to vector<8x8xf32>
    %cst_22 = arith.constant dense<0.000000e+00> : vector<8x8xf32>
    %37 = tpu.matmul %34, %35, %cst_22 {dimension_numbers = #tpu.dot_dimension_numbers<[1], [1], [0], [0], [0, 0, 1, 0], [], []>} : vector<8x8xf32>, vector<8x8xf32>, vector<8x8xf32> -> vector<8x8xf32>
    %cst_23 = arith.constant 0xFF800000 : f32
    %38 = vector.broadcast %cst_23 : f32 to vector<8x8xf32>
    %39 = arith.select %16, %38, %37 : vector<8x8xi1>, vector<8x8xf32>
    %cst_24 = arith.constant dense<0xFF800000> : vector<8xf32>
    %40 = vector.multi_reduction <maximumf>, %39, %cst_24 [1] : vector<8x8xf32> to vector<8xf32>
    %41 = vector.shape_cast %40 : vector<8xf32> to vector<8x1xf32>
    %42 = vector.broadcast %41 : vector<8x1xf32> to vector<8x8xf32>
    %43 = arith.subf %39, %42 : vector<8x8xf32>
    %44 = math.exp %43 : vector<8x8xf32>
    %cst_25 = arith.constant dense<0.000000e+00> : vector<8xf32>
    %45 = vector.multi_reduction <add>, %44, %cst_25 [1] : vector<8x8xf32> to vector<8xf32>
    %46 = vector.shape_cast %45 : vector<8xf32> to vector<8x1xf32>
    %47 = tpu.reciprocal %46 {approx = true} : vector<8x1xf32> -> vector<8x1xf32>
    %48 = vector.broadcast %47 : vector<8x1xf32> to vector<8x8xf32>
    %49 = arith.mulf %44, %48 : vector<8x8xf32>
    %cst_26 = arith.constant dense<0.000000e+00> : vector<8x8xf32>
    %50 = tpu.matmul %49, %36, %cst_26 {dimension_numbers = #tpu.dot_dimension_numbers<[1], [0], [0], [1], [0, 0, 1, 1], [], []>} : vector<8x8xf32>, vector<8x8xf32>, vector<8x8xf32> -> vector<8x8xf32>
    %51 = vector.extract_strided_slice %13 {offsets = [0, 16], sizes = [8, 8], strides = [1, 1]} : vector<8x32xf32> to vector<8x8xf32>
    %52 = vector.extract_strided_slice %9 {offsets = [0, 16], sizes = [8, 8], strides = [1, 1]} : vector<8x32xf32> to vector<8x8xf32>
    %53 = vector.extract_strided_slice %11 {offsets = [0, 16], sizes = [8, 8], strides = [1, 1]} : vector<8x32xf32> to vector<8x8xf32>
    %cst_27 = arith.constant dense<0.000000e+00> : vector<8x8xf32>
    %54 = tpu.matmul %51, %52, %cst_27 {dimension_numbers = #tpu.dot_dimension_numbers<[1], [1], [0], [0], [0, 0, 1, 0], [], []>} : vector<8x8xf32>, vector<8x8xf32>, vector<8x8xf32> -> vector<8x8xf32>
    %cst_28 = arith.constant 0xFF800000 : f32
    %55 = vector.broadcast %cst_28 : f32 to vector<8x8xf32>
    %56 = arith.select %16, %55, %54 : vector<8x8xi1>, vector<8x8xf32>
    %cst_29 = arith.constant dense<0xFF800000> : vector<8xf32>
    %57 = vector.multi_reduction <maximumf>, %56, %cst_29 [1] : vector<8x8xf32> to vector<8xf32>
    %58 = vector.shape_cast %57 : vector<8xf32> to vector<8x1xf32>
    %59 = vector.broadcast %58 : vector<8x1xf32> to vector<8x8xf32>
    %60 = arith.subf %56, %59 : vector<8x8xf32>
    %61 = math.exp %60 : vector<8x8xf32>
    %cst_30 = arith.constant dense<0.000000e+00> : vector<8xf32>
    %62 = vector.multi_reduction <add>, %61, %cst_30 [1] : vector<8x8xf32> to vector<8xf32>
    %63 = vector.shape_cast %62 : vector<8xf32> to vector<8x1xf32>
    %64 = tpu.reciprocal %63 {approx = true} : vector<8x1xf32> -> vector<8x1xf32>
    %65 = vector.broadcast %64 : vector<8x1xf32> to vector<8x8xf32>
    %66 = arith.mulf %61, %65 : vector<8x8xf32>
    %cst_31 = arith.constant dense<0.000000e+00> : vector<8x8xf32>
    %67 = tpu.matmul %66, %53, %cst_31 {dimension_numbers = #tpu.dot_dimension_numbers<[1], [0], [0], [1], [0, 0, 1, 1], [], []>} : vector<8x8xf32>, vector<8x8xf32>, vector<8x8xf32> -> vector<8x8xf32>
    %68 = vector.extract_strided_slice %13 {offsets = [0, 24], sizes = [8, 8], strides = [1, 1]} : vector<8x32xf32> to vector<8x8xf32>
    %69 = vector.extract_strided_slice %9 {offsets = [0, 24], sizes = [8, 8], strides = [1, 1]} : vector<8x32xf32> to vector<8x8xf32>
    %70 = vector.extract_strided_slice %11 {offsets = [0, 24], sizes = [8, 8], strides = [1, 1]} : vector<8x32xf32> to vector<8x8xf32>
    %cst_32 = arith.constant dense<0.000000e+00> : vector<8x8xf32>
    %71 = tpu.matmul %68, %69, %cst_32 {dimension_numbers = #tpu.dot_dimension_numbers<[1], [1], [0], [0], [0, 0, 1, 0], [], []>} : vector<8x8xf32>, vector<8x8xf32>, vector<8x8xf32> -> vector<8x8xf32>
    %cst_33 = arith.constant 0xFF800000 : f32
    %72 = vector.broadcast %cst_33 : f32 to vector<8x8xf32>
    %73 = arith.select %16, %72, %71 : vector<8x8xi1>, vector<8x8xf32>
    %cst_34 = arith.constant dense<0xFF800000> : vector<8xf32>
    %74 = vector.multi_reduction <maximumf>, %73, %cst_34 [1] : vector<8x8xf32> to vector<8xf32>
    %75 = vector.shape_cast %74 : vector<8xf32> to vector<8x1xf32>
    %76 = vector.broadcast %75 : vector<8x1xf32> to vector<8x8xf32>
    %77 = arith.subf %73, %76 : vector<8x8xf32>
    %78 = math.exp %77 : vector<8x8xf32>
    %cst_35 = arith.constant dense<0.000000e+00> : vector<8xf32>
    %79 = vector.multi_reduction <add>, %78, %cst_35 [1] : vector<8x8xf32> to vector<8xf32>
    %80 = vector.shape_cast %79 : vector<8xf32> to vector<8x1xf32>
    %81 = tpu.reciprocal %80 {approx = true} : vector<8x1xf32> -> vector<8x1xf32>
    %82 = vector.broadcast %81 : vector<8x1xf32> to vector<8x8xf32>
    %83 = arith.mulf %78, %82 : vector<8x8xf32>
    %cst_36 = arith.constant dense<0.000000e+00> : vector<8x8xf32>
    %84 = tpu.matmul %83, %70, %cst_36 {dimension_numbers = #tpu.dot_dimension_numbers<[1], [0], [0], [1], [0, 0, 1, 1], [], []>} : vector<8x8xf32>, vector<8x8xf32>, vector<8x8xf32> -> vector<8x8xf32>
    %85 = tpu.concatenate %33, %50, %67, %84 in 1 : vector<8x8xf32>, vector<8x8xf32>, vector<8x8xf32>, vector<8x8xf32> -> vector<8x32xf32>
    %c0_37 = arith.constant 0 : index
    %c0_38 = arith.constant 0 : index
    %86 = vector.load %arg7[%c0_37, %c0_38] : memref<32x32xf32, #tpu.memory_space<vmem>>, vector<32x32xf32>
    %cst_39 = arith.constant dense<0.000000e+00> : vector<8x32xf32>
    %87 = tpu.matmul %85, %86, %cst_39 {dimension_numbers = #tpu.dot_dimension_numbers<[1], [0], [0], [1], [0, 0, 1, 1], [], []>} : vector<8x32xf32>, vector<32x32xf32>, vector<8x32xf32> -> vector<8x32xf32>
    %c0_40 = arith.constant 0 : index
    %c0_41 = arith.constant 0 : index
    %c0_42 = arith.constant 0 : index
    %88 = vector.load %arg8[%c0_40, %c0_41, %c0_42] : memref<1x8x32xf32, #tpu.memory_space<vmem>>, vector<1x8x32xf32>
    %89 = vector.shape_cast %88 : vector<1x8x32xf32> to vector<8x32xf32>
    %90 = vector.shape_cast %87 : vector<8x32xf32> to vector<1x8x32xf32>
    tpu.vector_store %arg8[%c0_40, %c0_41, %c0_42], %90 {strides = array<i32>} : memref<1x8x32xf32, #tpu.memory_space<vmem>>, vector<1x8x32xf32>,
    return
  }
  func.func @transform_0(%arg0: i32) -> (i32, i32, i32) {
    %c0_i32 = arith.constant 0 : i32
    %c0_i32_0 = arith.constant 0 : i32
    %c0_i32_1 = arith.constant 0 : i32
    return %arg0, %c0_i32, %c0_i32_0 : i32, i32, i32
  }
  func.func @transform_1(%arg0: i32) -> (i32, i32, i32) {
    %c0_i32 = arith.constant 0 : i32
    %c0_i32_0 = arith.constant 0 : i32
    %c0_i32_1 = arith.constant 0 : i32
    return %arg0, %c0_i32, %c0_i32_0 : i32, i32, i32
  }
  func.func @transform_2(%arg0: i32) -> (i32, i32, i32) {
    %c0_i32 = arith.constant 0 : i32
    %c0_i32_0 = arith.constant 0 : i32
    %c0_i32_1 = arith.constant 0 : i32
    return %arg0, %c0_i32, %c0_i32_0 : i32, i32, i32
  }
  func.func @transform_3(%arg0: i32) -> (i32, i32) {
    %c0_i32 = arith.constant 0 : i32
    %c0_i32_0 = arith.constant 0 : i32
    %c0_i32_1 = arith.constant 0 : i32
    return %c0_i32, %c0_i32_0 : i32, i32
  }
  func.func @transform_4(%arg0: i32) -> (i32, i32) {
    %c0_i32 = arith.constant 0 : i32
    %c0_i32_0 = arith.constant 0 : i32
    %c0_i32_1 = arith.constant 0 : i32
    return %c0_i32, %c0_i32_0 : i32, i32
  }
  func.func @transform_5(%arg0: i32) -> (i32, i32) {
    %c0_i32 = arith.constant 0 : i32
    %c0_i32_0 = arith.constant 0 : i32
    %c0_i32_1 = arith.constant 0 : i32
    return %c0_i32, %c0_i32_0 : i32, i32
  }
  func.func @transform_6(%arg0: i32) -> (i32, i32) {
    %c0_i32 = arith.constant 0 : i32
    %c0_i32_0 = arith.constant 0 : i32
    %c0_i32_1 = arith.constant 0 : i32
    return %c0_i32, %c0_i32_0 : i32, i32
  }
  func.func @transform_7(%arg0: i32) -> (i32, i32, i32) {
    %c0_i32 = arith.constant 0 : i32
    %c0_i32_0 = arith.constant 0 : i32
    %c0_i32_1 = arith.constant 0 : i32
    return %arg0, %c0_i32, %c0_i32_0 : i32, i32, i32
  }
}

</mosaic_0001>

<llo_original>
// kernel: tpu_custom_call.1
$region0: #{tpu_custom_call.1}
  #allocation0 [shape = 'u32[]', space=smem, size = 0x4, offset = 0x4, fixed_abs, tag = 'smem constant byte address 0x4 - core index']
  #allocation1 [shape = 'u32[144,128]{1,0:T(1,128)}', space=vmem, size = 0x12000, scoped, tag = 'internal scratch']
  %s0 = inlined_call_operand.hbm [shape: f32[2,8,16], index: 0, kind: input, shape index: {}]
  %s1 = inlined_call_operand.hbm [shape: f32[2,8,16], index: 1, kind: input, shape index: {}]
  %s2 = inlined_call_operand.hbm [shape: f32[2,8,16], index: 2, kind: input, shape index: {}]
  %s3 = inlined_call_operand.hbm [shape: f32[16,32], index: 3, kind: input, shape index: {}]
  %s4 = inlined_call_operand.hbm [shape: f32[16,32], index: 4, kind: input, shape index: {}]
  %s5 = inlined_call_operand.vmem [shape: f32[16,32], index: 5, kind: input, shape index: {}]
  %s6 = inlined_call_operand.hbm [shape: f32[32,32], index: 6, kind: input, shape index: {}]
  %s7 = inlined_call_operand.hbm [shape: f32[2,8,32], index: 7, kind: output, shape index: {}]
  %s8 = sld [smem:[#allocation0]]
  $region85: #{tpu_custom_call.1} parent=0
    _
  %s10 = ssub.s32 1, %s8
  %s11 = scalar_select 0, %s10, %s8
  $region1: #{tpu_custom_call.1} parent=0
    #allocation2 [shape = 'u8[8192]{0}', space=vmem, size = 0x2000, scoped, tag = 'input window, operand 0']
    #allocation3 [shape = 's32[2]{0}', space=sflag, size = 0x8, scoped, tag = 'scoped memory for tpu_custom_call.1']
    #allocation4 [shape = 's32[2]{0}', space=sflag, size = 0x8, scoped, tag = 'scoped memory for tpu_custom_call.1']
    #allocation5 [shape = 'u8[8192]{0}', space=vmem, size = 0x2000, scoped, tag = 'input window, operand 1']
    #allocation6 [shape = 's32[2]{0}', space=sflag, size = 0x8, scoped, tag = 'scoped memory for tpu_custom_call.1']
    #allocation7 [shape = 'u8[8192]{0}', space=vmem, size = 0x2000, scoped, tag = 'input window, operand 2']
    #allocation8 [shape = 'u8[8192]{0}', space=vmem, size = 0x2000, scoped, tag = 'input window, operand 3, single buffered']
    #allocation9 [shape = 's32[1]{0}', space=sflag, size = 0x4, scoped, tag = 'scoped memory for tpu_custom_call.1']
    #allocation10 [shape = 'u8[8192]{0}', space=vmem, size = 0x2000, scoped, tag = 'input window, operand 4, single buffered']
    #allocation11 [shape = 'u8[16384]{0}', space=vmem, size = 0x4000, scoped, tag = 'input window, operand 6, single buffered']
    #allocation12 [shape = 's32[1]{0}', space=sflag, size = 0x4, scoped, tag = 'scoped memory for tpu_custom_call.1']
    #allocation13 [shape = 'u8[8192]{0}', space=vmem, size = 0x2000, scoped, tag = 'output window, operand 0']
    %12 = vsyncpa [#allocation3], 0
    %s13 = scalar_lea.sflag [#allocation3], 1
    %14 = vsyncpa %s13, 0
    %15 = vsyncpa [#allocation6], 0
    %s16 = scalar_lea.sflag [#allocation6], 1
    %17 = vsyncpa %s16, 0
    %18 = vsyncpa [#allocation9], 0
    %19 = vsyncpa [#allocation12], 0
    %20 = vsyncpa [#allocation4], 0
    %s21 = scalar_lea.sflag [#allocation4], 1
    %22 = vsyncpa %s21, 0
    loop: start=0, step=1, limit=4
    $region2: #{tpu_custom_call.1} parent=1 // loop_pre_header
      _
    $region3: #{tpu_custom_call.1} parent=1 // loop_header
      %s24 = sphi 0, %s28
      %p25 = scmp.ge.s32.totalorder %s24, 4
      %s34 = sphi 0, %s36
      %s37 = sphi 0, %s34
      %s38 = sphi 0, %s37
      %s54 = sphi 0, %s38
      %s60 = sphi 0, %s62
      %s63 = sphi 0, %s60
      %s64 = sphi 0, %s63
      %s80 = sphi 0, %s64
      %s86 = sphi 0, %s88
      %s89 = sphi 0, %s86
      %s90 = sphi 0, %s89
      %s106 = sphi 0, %s90
      %s110 = sphi 0, %s110
      %s112 = sphi 0, %s110
      %s113 = sphi 0, %s112
      %s127 = sphi 0, %s113
      %s131 = sphi 0, %s131
      %s133 = sphi 0, %s131
      %s134 = sphi 0, %s133
      %s148 = sphi 0, %s134
      %s152 = sphi 0, %s152
      %s154 = sphi 0, %s152
      %s155 = sphi 0, %s154
      %s169 = sphi 0, %s155
      %s173 = sphi 0, %s173
      %s175 = sphi 0, %s173
      %s176 = sphi 0, %s175
      %s190 = sphi 0, %s176
      %s196 = sphi 0, %s198
      %s199 = sphi 0, %s196
      %s200 = sphi 0, %s199
      %s216 = sphi 0, %s200
    $region4: #{tpu_custom_call.1} parent=1 // loop_header_branch
      %27 = sbr.rel (%p25) target = $region8
    $region5: #{tpu_custom_call.1} parent=1 // loop_body
      %s29 = ssub.s32 %s24, 1
      %s30 = ssub.s32 %s24, 2
      %s31 = sadd.s32 %s24, 1
      %s32 = ssub.s32 %s24, %s31
      %p33 = scmp.eq.s32.totalorder %s32, 0
      %s35 = sadd.s32 %s34, 1
      %s36 = scalar_select %p33, %s34, %s35
      %p39 = pneg %p33
      %p40 = scmp.eq.s32.totalorder %s24, 1
      %p41 = por %p39, %p40
      %p42 = scmp.ne.s32.totalorder %s34, %s37
      %p43 = scmp.eq.s32.totalorder %s24, 0
      %p44 = por %p42, %p43
      %p45 = scmp.ne.s32.totalorder %s34, %s37
      %p46 = scmp.eq.s32.totalorder %s29, 1
      %p47 = por %p45, %p46
      %p48 = scmp.ne.s32.totalorder %s37, %s38
      %p49 = scmp.eq.s32.totalorder %s29, 0
      %p50 = por %p48, %p49
      %p51 = scmp.ne.s32.totalorder %s37, %s38
      %p52 = scmp.eq.s32.totalorder %s30, 1
      %p53 = por %p51, %p52
      %p55 = scmp.ne.s32.totalorder %s38, %s54
      %p56 = scmp.eq.s32.totalorder %s30, 0
      %p57 = por %p55, %p56
      %s58 = ssub.s32 %s24, %s31
      %p59 = scmp.eq.s32.totalorder %s58, 0
      %s61 = sadd.s32 %s60, 1
      %s62 = scalar_select %p59, %s60, %s61
      %p65 = pneg %p59
      %p66 = scmp.eq.s32.totalorder %s24, 1
      %p67 = por %p65, %p66
      %p68 = scmp.ne.s32.totalorder %s60, %s63
      %p69 = scmp.eq.s32.totalorder %s24, 0
      %p70 = por %p68, %p69
      %p71 = scmp.ne.s32.totalorder %s60, %s63
      %p72 = scmp.eq.s32.totalorder %s29, 1
      %p73 = por %p71, %p72
      %p74 = scmp.ne.s32.totalorder %s63, %s64
      %p75 = scmp.eq.s32.totalorder %s29, 0
      %p76 = por %p74, %p75
      %p77 = scmp.ne.s32.totalorder %s63, %s64
      %p78 = scmp.eq.s32.totalorder %s30, 1
      %p79 = por %p77, %p78
      %p81 = scmp.ne.s32.totalorder %s64, %s80
      %p82 = scmp.eq.s32.totalorder %s30, 0
      %p83 = por %p81, %p82
      %s84 = ssub.s32 %s24, %s31
      %p85 = scmp.eq.s32.totalorder %s84, 0
      %s87 = sadd.s32 %s86, 1
      %s88 = scalar_select %p85, %s86, %s87
      %p91 = pneg %p85
      %p92 = scmp.eq.s32.totalorder %s24, 1
      %p93 = por %p91, %p92
      %p94 = scmp.ne.s32.totalorder %s86, %s89
      %p95 = scmp.eq.s32.totalorder %s24, 0
      %p96 = por %p94, %p95
      %p97 = scmp.ne.s32.totalorder %s86, %s89
      %p98 = scmp.eq.s32.totalorder %s29, 1
      %p99 = por %p97, %p98
      %p100 = scmp.ne.s32.totalorder %s89, %s90
      %p101 = scmp.eq.s32.totalorder %s29, 0
      %p102 = por %p100, %p101
      %p103 = scmp.ne.s32.totalorder %s89, %s90
      %p104 = scmp.eq.s32.totalorder %s30, 1
      %p105 = por %p103, %p104
      %p107 = scmp.ne.s32.totalorder %s90, %s106
      %p108 = scmp.eq.s32.totalorder %s30, 0
      %p109 = por %p107, %p108
      %s111 = sadd.s32 %s110, 1
      %p114 = scmp.eq.s32.totalorder %s24, 1
      %p115 = scmp.ne.s32.totalorder %s110, %s112
      %p116 = scmp.eq.s32.totalorder %s24, 0
      %p117 = por %p115, %p116
      %p118 = scmp.ne.s32.totalorder %s110, %s112
      %p119 = scmp.eq.s32.totalorder %s29, 1
      %p120 = por %p118, %p119
      %p121 = scmp.ne.s32.totalorder %s112, %s113
      %p122 = scmp.eq.s32.totalorder %s29, 0
      %p123 = por %p121, %p122
      %p124 = scmp.ne.s32.totalorder %s112, %s113
      %p125 = scmp.eq.s32.totalorder %s30, 1
      %p126 = por %p124, %p125
      %p128 = scmp.ne.s32.totalorder %s113, %s127
      %p129 = scmp.eq.s32.totalorder %s30, 0
      %p130 = por %p128, %p129
      %s132 = sadd.s32 %s131, 1
      %p135 = scmp.eq.s32.totalorder %s24, 1
      %p136 = scmp.ne.s32.totalorder %s131, %s133
      %p137 = scmp.eq.s32.totalorder %s24, 0
      %p138 = por %p136, %p137
      %p139 = scmp.ne.s32.totalorder %s131, %s133
      %p140 = scmp.eq.s32.totalorder %s29, 1
      %p141 = por %p139, %p140
      %p142 = scmp.ne.s32.totalorder %s133, %s134
      %p143 = scmp.eq.s32.totalorder %s29, 0
      %p144 = por %p142, %p143
      %p145 = scmp.ne.s32.totalorder %s133, %s134
      %p146 = scmp.eq.s32.totalorder %s30, 1
      %p147 = por %p145, %p146
      %p149 = scmp.ne.s32.totalorder %s134, %s148
      %p150 = scmp.eq.s32.totalorder %s30, 0
      %p151 = por %p149, %p150
      %s153 = sadd.s32 %s152, 1
      %p156 = scmp.eq.s32.totalorder %s24, 1
      %p157 = scmp.ne.s32.totalorder %s152, %s154
      %p158 = scmp.eq.s32.totalorder %s24, 0
      %p159 = por %p157, %p158
      %p160 = scmp.ne.s32.totalorder %s152, %s154
      %p161 = scmp.eq.s32.totalorder %s29, 1
      %p162 = por %p160, %p161
      %p163 = scmp.ne.s32.totalorder %s154, %s155
      %p164 = scmp.eq.s32.totalorder %s29, 0
      %p165 = por %p163, %p164
      %p166 = scmp.ne.s32.totalorder %s154, %s155
      %p167 = scmp.eq.s32.totalorder %s30, 1
      %p168 = por %p166, %p167
      %p170 = scmp.ne.s32.totalorder %s155, %s169
      %p171 = scmp.eq.s32.totalorder %s30, 0
      %p172 = por %p170, %p171
      %s174 = sadd.s32 %s173, 1
      %p177 = scmp.eq.s32.totalorder %s24, 1
      %p178 = scmp.ne.s32.totalorder %s173, %s175
      %p179 = scmp.eq.s32.totalorder %s24, 0
      %p180 = por %p178, %p179
      %p181 = scmp.ne.s32.totalorder %s173, %s175
      %p182 = scmp.eq.s32.totalorder %s29, 1
      %p183 = por %p181, %p182
      %p184 = scmp.ne.s32.totalorder %s175, %s176
      %p185 = scmp.eq.s32.totalorder %s29, 0
      %p186 = por %p184, %p185
      %p187 = scmp.ne.s32.totalorder %s175, %s176
      %p188 = scmp.eq.s32.totalorder %s30, 1
      %p189 = por %p187, %p188
      %p191 = scmp.ne.s32.totalorder %s176, %s190
      %p192 = scmp.eq.s32.totalorder %s30, 0
      %p193 = por %p191, %p192
      %s194 = ssub.s32 %s24, %s31
      %p195 = scmp.eq.s32.totalorder %s194, 0
      %s197 = sadd.s32 %s196, 1
      %s198 = scalar_select %p195, %s196, %s197
      %p201 = pneg %p195
      %p202 = scmp.eq.s32.totalorder %s24, 1
      %p203 = por %p201, %p202
      %p204 = scmp.ne.s32.totalorder %s196, %s199
      %p205 = scmp.eq.s32.totalorder %s24, 0
      %p206 = por %p204, %p205
      %p207 = scmp.ne.s32.totalorder %s196, %s199
      %p208 = scmp.eq.s32.totalorder %s29, 1
      %p209 = por %p207, %p208
      %p210 = scmp.ne.s32.totalorder %s199, %s200
      %p211 = scmp.eq.s32.totalorder %s29, 0
      %p212 = por %p210, %p211
      %p213 = scmp.ne.s32.totalorder %s199, %s200
      %p214 = scmp.eq.s32.totalorder %s30, 1
      %p215 = por %p213, %p214
      %p217 = scmp.ne.s32.totalorder %s200, %s216
      %p218 = scmp.eq.s32.totalorder %s30, 0
      %p219 = por %p217, %p218
      %p220 = scmp.le.s32.totalorder 1, %s24
      %p221 = scmp.lt.s32.totalorder %s24, 3
      %p222 = pnand %p220, %p221
      %p223 = pneg %p222
      // Predicated region
      $region9: #{tpu_custom_call.1} parent=5 // pred_check
        _
      $region10: #{tpu_custom_call.1} parent=5 // pred_check_branch
        %225 = sbr.rel (%p222) target = $region12
      $region11: #{tpu_custom_call.1} parent=5 // pred_region
        %s226 = ssub.s32 %s24, 1
        // Predicated region
        $region13: #{tpu_custom_call.1} parent=11 // pred_check
          %p227 = pneg %p123
        $region14: #{tpu_custom_call.1} parent=11 // pred_check_branch
          %229 = sbr.rel (%p227) target = $region16
        $region15: #{tpu_custom_call.1} parent=11 // pred_region
          %s231 = ssub.s32 256, 256
          %232 = vsyncadd [#allocation9], %s231
          %s233 = sshll.u32 [#allocation8], 4
          %s234 = int_to_ptr.vmem [resolvable:$true] %s233
          %239 = dma.hbm_to_vmem [thread:$0]  %s3, 256, %s234, [#allocation9], 128, 128, 8
        $region16: #{tpu_custom_call.1} parent=11 // pred_fallthru
          _
        // Predicated region
        $region17: #{tpu_custom_call.1} parent=11 // pred_check
          %p240 = pneg %p144
        $region18: #{tpu_custom_call.1} parent=11 // pred_check_branch
          %242 = sbr.rel (%p240) target = $region20
        $region19: #{tpu_custom_call.1} parent=11 // pred_region
          %s244 = ssub.s32 256, 256
          %245 = vsyncadd [#allocation9], %s244
          %s246 = sshll.u32 [#allocation10], 4
          %s247 = int_to_ptr.vmem [resolvable:$true] %s246
          %252 = dma.hbm_to_vmem [thread:$0]  %s4, 256, %s247, [#allocation9], 128, 128, 8
        $region20: #{tpu_custom_call.1} parent=11 // pred_fallthru
          _
        // Predicated region
        $region21: #{tpu_custom_call.1} parent=11 // pred_check
          %p253 = pneg %p165
        $region22: #{tpu_custom_call.1} parent=11 // pred_check_branch
          %255 = sbr.rel (%p253) target = $region24
        $region23: #{tpu_custom_call.1} parent=11 // pred_region
          _
        $region24: #{tpu_custom_call.1} parent=11 // pred_fallthru
          _
        // Predicated region
        $region25: #{tpu_custom_call.1} parent=11 // pred_check
          %p256 = pneg %p186
        $region26: #{tpu_custom_call.1} parent=11 // pred_check_branch
          %258 = sbr.rel (%p256) target = $region28
        $region27: #{tpu_custom_call.1} parent=11 // pred_region
          %s260 = ssub.s32 512, 512
          %261 = vsyncadd [#allocation12], %s260
          %s262 = sshll.u32 [#allocation11], 4
          %s263 = int_to_ptr.vmem [resolvable:$true] %s262
          %268 = dma.hbm_to_vmem [thread:$0]  %s6, 512, %s263, [#allocation12], 128, 128, 8
        $region28: #{tpu_custom_call.1} parent=11 // pred_fallthru
          _
      $region12: #{tpu_custom_call.1} parent=5 // pred_fallthru
        _
      %p269 = scmp.lt.s32.totalorder %s24, 2
      // Predicated region
      $region29: #{tpu_custom_call.1} parent=5 // pred_check
        %p270 = pneg %p269
      $region30: #{tpu_custom_call.1} parent=5 // pred_check_branch
        %272 = sbr.rel (%p270) target = $region32
      $region31: #{tpu_custom_call.1} parent=5 // pred_region
        // Predicated region
        $region33: #{tpu_custom_call.1} parent=31 // pred_check
          %p273 = pneg %p44
        $region34: #{tpu_custom_call.1} parent=31 // pred_check_branch
          %275 = sbr.rel (%p273) target = $region36
        $region35: #{tpu_custom_call.1} parent=31 // pred_region
          %s276 = sand.u32 %s34, 1
          %s277 = scalar_lea.sflag [#allocation3], %s276
          %s278 = sand.u32 %s34, 1
          %s279 = smul.addr %s278, 8
          %s280 = scalar_lea.vmem [#allocation2], %s279
          %s282 = ssub.s32 128, 128
          %283 = vsyncadd %s277, %s282
          %s284 = smul.addr %s24, 128
          %s285 = scalar_lea.hbm %s0, %s284
          %s287 = sshll.u32 %s280, 4
          %s288 = int_to_ptr.vmem [resolvable:$true] %s287
          %290 = dma.hbm_to_vmem [thread:$0]  %s285, 128, %s288, %s277
        $region36: #{tpu_custom_call.1} parent=31 // pred_fallthru
          _
        // Predicated region
        $region37: #{tpu_custom_call.1} parent=31 // pred_check
          %p291 = pneg %p70
        $region38: #{tpu_custom_call.1} parent=31 // pred_check_branch
          %293 = sbr.rel (%p291) target = $region40
        $region39: #{tpu_custom_call.1} parent=31 // pred_region
          %s294 = sand.u32 %s24, 1
          %s295 = scalar_lea.sflag [#allocation6], %s294
          %s296 = sand.u32 %s60, 1
          %s297 = smul.addr %s296, 8
          %s298 = scalar_lea.vmem [#allocation5], %s297
          %s300 = ssub.s32 128, 128
          %301 = vsyncadd %s295, %s300
          %s302 = smul.addr %s24, 128
          %s303 = scalar_lea.hbm %s1, %s302
          %s305 = sshll.u32 %s298, 4
          %s306 = int_to_ptr.vmem [resolvable:$true] %s305
          %308 = dma.hbm_to_vmem [thread:$0]  %s303, 128, %s306, %s295
        $region40: #{tpu_custom_call.1} parent=31 // pred_fallthru
          _
        // Predicated region
        $region41: #{tpu_custom_call.1} parent=31 // pred_check
          %p309 = pneg %p96
        $region42: #{tpu_custom_call.1} parent=31 // pred_check_branch
          %311 = sbr.rel (%p309) target = $region44
        $region43: #{tpu_custom_call.1} parent=31 // pred_region
          %s312 = sand.u32 %s24, 1
          %s313 = scalar_lea.sflag [#allocation6], %s312
          %s314 = sand.u32 %s86, 1
          %s315 = smul.addr %s314, 8
          %s316 = scalar_lea.vmem [#allocation7], %s315
          %s318 = ssub.s32 128, 128
          %319 = vsyncadd %s313, %s318
          %s320 = smul.addr %s24, 128
          %s321 = scalar_lea.hbm %s2, %s320
          %s323 = sshll.u32 %s316, 4
          %s324 = int_to_ptr.vmem [resolvable:$true] %s323
          %326 = dma.hbm_to_vmem [thread:$0]  %s321, 128, %s324, %s313
        $region44: #{tpu_custom_call.1} parent=31 // pred_fallthru
          _
      $region32: #{tpu_custom_call.1} parent=5 // pred_fallthru
        _
      %p327 = scmp.le.s32.totalorder 1, %s24
      %p328 = scmp.lt.s32.totalorder %s24, 3
      %p329 = pnand %p327, %p328
      %p330 = pneg %p329
      // Predicated region
      $region45: #{tpu_custom_call.1} parent=5 // pred_check
        _
      $region46: #{tpu_custom_call.1} parent=5 // pred_check_branch
        %332 = sbr.rel (%p329) target = $region48
      $region47: #{tpu_custom_call.1} parent=5 // pred_region
        %s333 = ssub.s32 %s24, 1
        %s334 = sand.u32 %s37, 1
        %s335 = scalar_lea.sflag [#allocation3], %s334
        %s336 = sand.u32 %s37, 1
        %s337 = smul.addr %s336, 8
        %s338 = scalar_lea.vmem [#allocation2], %s337
        // Predicated region
        $region49: #{tpu_custom_call.1} parent=47 // pred_check
          %p339 = pneg %p50
        $region50: #{tpu_custom_call.1} parent=47 // pred_check_branch
          %341 = sbr.rel (%p339) target = $region52
        $region51: #{tpu_custom_call.1} parent=47 // pred_region
          %342 = dma.done %s335, 128
        $region52: #{tpu_custom_call.1} parent=47 // pred_fallthru
          _
        %s343 = sand.u32 %s29, 1
        %s344 = scalar_lea.sflag [#allocation6], %s343
        %s345 = sand.u32 %s63, 1
        %s346 = smul.addr %s345, 8
        %s347 = scalar_lea.vmem [#allocation5], %s346
        // Predicated region
        $region53: #{tpu_custom_call.1} parent=47 // pred_check
          %p348 = pneg %p76
        $region54: #{tpu_custom_call.1} parent=47 // pred_check_branch
          %350 = sbr.rel (%p348) target = $region56
        $region55: #{tpu_custom_call.1} parent=47 // pred_region
          %351 = dma.done %s344, 128
        $region56: #{tpu_custom_call.1} parent=47 // pred_fallthru
          _
        %s352 = sand.u32 %s29, 1
        %s353 = scalar_lea.sflag [#allocation6], %s352
        %s354 = sand.u32 %s89, 1
        %s355 = smul.addr %s354, 8
        %s356 = scalar_lea.vmem [#allocation7], %s355
        // Predicated region
        $region57: #{tpu_custom_call.1} parent=47 // pred_check
          %p357 = pneg %p102
        $region58: #{tpu_custom_call.1} parent=47 // pred_check_branch
          %359 = sbr.rel (%p357) target = $region60
        $region59: #{tpu_custom_call.1} parent=47 // pred_region
          %360 = dma.done %s353, 128
        $region60: #{tpu_custom_call.1} parent=47 // pred_fallthru
          _
        // Predicated region
        $region61: #{tpu_custom_call.1} parent=47 // pred_check
          %p361 = pneg %p123
        $region62: #{tpu_custom_call.1} parent=47 // pred_check_branch
          %363 = sbr.rel (%p361) target = $region64
        $region63: #{tpu_custom_call.1} parent=47 // pred_region
          %364 = dma.done [#allocation9], 256
        $region64: #{tpu_custom_call.1} parent=47 // pred_fallthru
          _
        // Predicated region
        $region65: #{tpu_custom_call.1} parent=47 // pred_check
          %p365 = pneg %p144
        $region66: #{tpu_custom_call.1} parent=47 // pred_check_branch
          %367 = sbr.rel (%p365) target = $region68
        $region67: #{tpu_custom_call.1} parent=47 // pred_region
          %368 = dma.done [#allocation9], 256
        $region68: #{tpu_custom_call.1} parent=47 // pred_fallthru
          _
        // Predicated region
        $region69: #{tpu_custom_call.1} parent=47 // pred_check
          %p369 = pneg %p186
        $region70: #{tpu_custom_call.1} parent=47 // pred_check_branch
          %371 = sbr.rel (%p369) target = $region72
        $region71: #{tpu_custom_call.1} parent=47 // pred_region
          %372 = dma.done [#allocation12], 512
        $region72: #{tpu_custom_call.1} parent=47 // pred_fallthru
          _
        %s373 = sand.u32 %s37, 1
        %s374 = scalar_lea.sflag [#allocation3], %s373
        %s375 = sand.u32 %s37, 1
        %s376 = smul.addr %s375, 8
        %s377 = scalar_lea.vmem [#allocation2], %s376
        %p378 = pneg %p50
        %p379 = pneg %p47
        %s380 = sand.u32 %s29, 1
        %s381 = scalar_lea.sflag [#allocation6], %s380
        %s382 = sand.u32 %s63, 1
        %s383 = smul.addr %s382, 8
        %s384 = scalar_lea.vmem [#allocation5], %s383
        %p385 = pneg %p76
        %p386 = pneg %p73
        %s387 = sand.u32 %s29, 1
        %s388 = scalar_lea.sflag [#allocation6], %s387
        %s389 = sand.u32 %s89, 1
        %s390 = smul.addr %s389, 8
        %s391 = scalar_lea.vmem [#allocation7], %s390
        %p392 = pneg %p102
        %p393 = pneg %p99
        %p394 = pneg %p123
        %p395 = pneg %p120
        %p396 = pneg %p144
        %p397 = pneg %p141
        %p398 = pneg %p165
        %p399 = pneg %p162
        %p400 = pneg %p186
        %p401 = pneg %p183
        %p402 = pneg %p212
        %p403 = pneg %p209
        %s404 = sand.u32 %s199, 1
        %s405 = scalar_lea.sflag [#allocation4], %s404
        %s406 = sand.u32 %s199, 1
        %s407 = smul.addr %s406, 8
        %s408 = scalar_lea.vmem [#allocation13], %s407
        %v409 = vld [vmem:[%s338] sm:$0xff]
        %v410 = vld [vmem:[%s347] sm:$0xff]
        %v411 = vld [vmem:[%s356] sm:$0xff]
        %v412 = vld [vmem:[#allocation8] sm:$0xff]
        %v413 = vld [vmem:[#allocation8 + $0x8] sm:$0xff]
        %vm414 = vcmask 130048
        %v416 = vsel %vm414, %v409, 0
        %418 = vmatprep.subr.mxu0 0.0
        %419 = vmatpush1.msra.mxu0 %v412
        %420 = vmatprep.subr.mxu0 0.0
        %421 = vmatpush1.msra.mxu0 %v413
        %422 = vmatprep.subr.mxu0 0.0
        %423 = vmatpush1.msra.mxu0 0.0
        %424 = vmatprep.subr.mxu0 0.0
        %425 = vmatpush1.msra.mxu0 0.0
        %426 = vmatprep.subr.mxu0 0.0
        %427 = vmatpush1.msra.mxu0 0.0
        %428 = vmatprep.subr.mxu0 0.0
        %429 = vmatpush1.msra.mxu0 0.0
        %430 = vmatprep.subr.mxu0 0.0
        %431 = vmatpush1.msra.mxu0 0.0
        %432 = vmatprep.subr.mxu0 0.0
        %433 = vmatpush1.msra.mxu0 0.0
        %434 = vmatprep.subr.mxu0 0.0
        %435 = vmatpush1.msra.mxu0 0.0
        %436 = vmatprep.subr.mxu0 0.0
        %437 = vmatpush1.msra.mxu0 0.0
        %438 = vmatprep.subr.mxu0 0.0
        %439 = vmatpush1.msra.mxu0 0.0
        %440 = vmatprep.subr.mxu0 0.0
        %441 = vmatpush1.msra.mxu0 0.0
        %442 = vmatprep.subr.mxu0 0.0
        %443 = vmatpush1.msra.mxu0 0.0
        %444 = vmatprep.subr.mxu0 0.0
        %445 = vmatpush1.msra.mxu0 0.0
        %446 = vmatprep.subr.mxu0 0.0
        %447 = vmatpush1.msra.mxu0 0.0
        %448 = vmatprep.subr.mxu0 0.0
        %449 = vmatpush1.msra.mxu0 0.0
        %450 = vmatprep.subr.mxu0 0.0
        %451 = vmatpush1.msra.mxu0 0.0
        %452 = vmatprep.subr.mxu0 0.0
        %453 = vmatpush1.msra.mxu0 0.0
        %454 = vmatprep.subr.mxu0 0.0
        %455 = vmatpush1.msra.mxu0 0.0
        %456 = vmatprep.subr.mxu0 0.0
        %457 = vmatpush1.msra.mxu0 0.0
        %458 = vmatprep.subr.mxu0 0.0
        %459 = vmatpush1.msra.mxu0 0.0
        %460 = vmatprep.subr.mxu0 0.0
        %461 = vmatpush1.msra.mxu0 0.0
        %462 = vmatprep.subr.mxu0 0.0
        %463 = vmatpush1.msra.mxu0 0.0
        %464 = vmatprep.subr.mxu0 0.0
        %465 = vmatpush1.msra.mxu0 0.0
        %466 = vmatprep.subr.mxu0 0.0
        %467 = vmatpush1.msra.mxu0 0.0
        %468 = vmatprep.subr.mxu0 0.0
        %469 = vmatpush1.msra.mxu0 0.0
        %470 = vmatprep.subr.mxu0 0.0
        %471 = vmatpush1.msra.mxu0 0.0
        %472 = vmatprep.subr.mxu0 0.0
        %473 = vmatpush1.msra.mxu0 0.0
        %474 = vmatprep.subr.mxu0 0.0
        %475 = vmatpush1.msra.mxu0 0.0
        %476 = vmatprep.subr.mxu0 0.0
        %477 = vmatpush1.msra.mxu0 0.0
        %478 = vmatprep.subr.mxu0 0.0
        %479 = vmatpush1.msra.mxu0 0.0
        %480 = vmatprep.subr.mxu0 0.0
        %481 = vmatpush1.msra.mxu0 0.0
        %482 = vmatprep.mubr.f32.mxu0 0.0
        %483 = vmatmul.mubr.f32.gmra.mrb[0].mxu0 %v416
        %v484 = vpop.f32.mrb[0].mxu0
        %v485 = vadd.f32 0.0, %v484
        %v486 = vpop.f32.mrb[0].mxu0
        %487 = vdwg.mxu0
        %v488 = vld [vmem:[#allocation10] sm:$0xff]
        %v489 = vld [vmem:[#allocation10 + $0x8] sm:$0xff]
        %v491 = vsel %vm414, %v410, 0
        %493 = vmatprep.subr.mxu0 0.0
        %494 = vmatpush1.msra.mxu0 %v488
        %495 = vmatprep.subr.mxu0 0.0
        %496 = vmatpush1.msra.mxu0 %v489
        %497 = vmatprep.subr.mxu0 0.0
        %498 = vmatpush1.msra.mxu0 0.0
        %499 = vmatprep.subr.mxu0 0.0
        %500 = vmatpush1.msra.mxu0 0.0
        %501 = vmatprep.subr.mxu0 0.0
        %502 = vmatpush1.msra.mxu0 0.0
        %503 = vmatprep.subr.mxu0 0.0
        %504 = vmatpush1.msra.mxu0 0.0
        %505 = vmatprep.subr.mxu0 0.0
        %506 = vmatpush1.msra.mxu0 0.0
        %507 = vmatprep.subr.mxu0 0.0
        %508 = vmatpush1.msra.mxu0 0.0
        %509 = vmatprep.subr.mxu0 0.0
        %510 = vmatpush1.msra.mxu0 0.0
        %511 = vmatprep.subr.mxu0 0.0
        %512 = vmatpush1.msra.mxu0 0.0
        %513 = vmatprep.subr.mxu0 0.0
        %514 = vmatpush1.msra.mxu0 0.0
        %515 = vmatprep.subr.mxu0 0.0
        %516 = vmatpush1.msra.mxu0 0.0
        %517 = vmatprep.subr.mxu0 0.0
        %518 = vmatpush1.msra.mxu0 0.0
        %519 = vmatprep.subr.mxu0 0.0
        %520 = vmatpush1.msra.mxu0 0.0
        %521 = vmatprep.subr.mxu0 0.0
        %522 = vmatpush1.msra.mxu0 0.0
        %523 = vmatprep.subr.mxu0 0.0
        %524 = vmatpush1.msra.mxu0 0.0
        %525 = vmatprep.subr.mxu0 0.0
        %526 = vmatpush1.msra.mxu0 0.0
        %527 = vmatprep.subr.mxu0 0.0
        %528 = vmatpush1.msra.mxu0 0.0
        %529 = vmatprep.subr.mxu0 0.0
        %530 = vmatpush1.msra.mxu0 0.0
        %531 = vmatprep.subr.mxu0 0.0
        %532 = vmatpush1.msra.mxu0 0.0
        %533 = vmatprep.subr.mxu0 0.0
        %534 = vmatpush1.msra.mxu0 0.0
        %535 = vmatprep.subr.mxu0 0.0
        %536 = vmatpush1.msra.mxu0 0.0
        %537 = vmatprep.subr.mxu0 0.0
        %538 = vmatpush1.msra.mxu0 0.0
        %539 = vmatprep.subr.mxu0 0.0
        %540 = vmatpush1.msra.mxu0 0.0
        %541 = vmatprep.subr.mxu0 0.0
        %542 = vmatpush1.msra.mxu0 0.0
        %543 = vmatprep.subr.mxu0 0.0
        %544 = vmatpush1.msra.mxu0 0.0
        %545 = vmatprep.subr.mxu0 0.0
        %546 = vmatpush1.msra.mxu0 0.0
        %547 = vmatprep.subr.mxu0 0.0
        %548 = vmatpush1.msra.mxu0 0.0
        %549 = vmatprep.subr.mxu0 0.0
        %550 = vmatpush1.msra.mxu0 0.0
        %551 = vmatprep.subr.mxu0 0.0
        %552 = vmatpush1.msra.mxu0 0.0
        %553 = vmatprep.subr.mxu0 0.0
        %554 = vmatpush1.msra.mxu0 0.0
        %555 = vmatprep.subr.mxu0 0.0
        %556 = vmatpush1.msra.mxu0 0.0
        %557 = vmatprep.mubr.f32.mxu0 0.0
        %558 = vmatmul.mubr.f32.gmra.mrb[0].mxu0 %v491
        %v559 = vpop.f32.mrb[0].mxu0
        %v560 = vadd.f32 0.0, %v559
        %v561 = vpop.f32.mrb[0].mxu0
        %562 = vdwg.mxu0
        %v563 = vld [vmem:[%s5] sm:$0xff]
        %v564 = vld [vmem:[%s5 + $0x8] sm:$0xff]
        %v566 = vsel %vm414, %v411, 0
        %568 = vmatprep.subr.mxu0 0.0
        %569 = vmatpush1.msra.mxu0 %v563
        %570 = vmatprep.subr.mxu0 0.0
        %571 = vmatpush1.msra.mxu0 %v564
        %572 = vmatprep.subr.mxu0 0.0
        %573 = vmatpush1.msra.mxu0 0.0
        %574 = vmatprep.subr.mxu0 0.0
        %575 = vmatpush1.msra.mxu0 0.0
        %576 = vmatprep.subr.mxu0 0.0
        %577 = vmatpush1.msra.mxu0 0.0
        %578 = vmatprep.subr.mxu0 0.0
        %579 = vmatpush1.msra.mxu0 0.0
        %580 = vmatprep.subr.mxu0 0.0
        %581 = vmatpush1.msra.mxu0 0.0
        %582 = vmatprep.subr.mxu0 0.0
        %583 = vmatpush1.msra.mxu0 0.0
        %584 = vmatprep.subr.mxu0 0.0
        %585 = vmatpush1.msra.mxu0 0.0
        %586 = vmatprep.subr.mxu0 0.0
        %587 = vmatpush1.msra.mxu0 0.0
        %588 = vmatprep.subr.mxu0 0.0
        %589 = vmatpush1.msra.mxu0 0.0
        %590 = vmatprep.subr.mxu0 0.0
        %591 = vmatpush1.msra.mxu0 0.0
        %592 = vmatprep.subr.mxu0 0.0
        %593 = vmatpush1.msra.mxu0 0.0
        %594 = vmatprep.subr.mxu0 0.0
        %595 = vmatpush1.msra.mxu0 0.0
        %596 = vmatprep.subr.mxu0 0.0
        %597 = vmatpush1.msra.mxu0 0.0
        %598 = vmatprep.subr.mxu0 0.0
        %599 = vmatpush1.msra.mxu0 0.0
        %600 = vmatprep.subr.mxu0 0.0
        %601 = vmatpush1.msra.mxu0 0.0
        %602 = vmatprep.subr.mxu0 0.0
        %603 = vmatpush1.msra.mxu0 0.0
        %604 = vmatprep.subr.mxu0 0.0
        %605 = vmatpush1.msra.mxu0 0.0
        %606 = vmatprep.subr.mxu0 0.0
        %607 = vmatpush1.msra.mxu0 0.0
        %608 = vmatprep.subr.mxu0 0.0
        %609 = vmatpush1.msra.mxu0 0.0
        %610 = vmatprep.subr.mxu0 0.0
        %611 = vmatpush1.msra.mxu0 0.0
        %612 = vmatprep.subr.mxu0 0.0
        %613 = vmatpush1.msra.mxu0 0.0
        %614 = vmatprep.subr.mxu0 0.0
        %615 = vmatpush1.msra.mxu0 0.0
        %616 = vmatprep.subr.mxu0 0.0
        %617 = vmatpush1.msra.mxu0 0.0
        %618 = vmatprep.subr.mxu0 0.0
        %619 = vmatpush1.msra.mxu0 0.0
        %620 = vmatprep.subr.mxu0 0.0
        %621 = vmatpush1.msra.mxu0 0.0
        %622 = vmatprep.subr.mxu0 0.0
        %623 = vmatpush1.msra.mxu0 0.0
        %624 = vmatprep.subr.mxu0 0.0
        %625 = vmatpush1.msra.mxu0 0.0
        %626 = vmatprep.subr.mxu0 0.0
        %627 = vmatpush1.msra.mxu0 0.0
        %628 = vmatprep.subr.mxu0 0.0
        %629 = vmatpush1.msra.mxu0 0.0
        %630 = vmatprep.subr.mxu0 0.0
        %631 = vmatpush1.msra.mxu0 0.0
        %632 = vmatprep.mubr.f32.mxu0 0.0
        %633 = vmatmul.mubr.f32.gmra.mrb[0].mxu0 %v566
        %v634 = vpop.f32.mrb[0].mxu0
        %v635 = vadd.f32 0.0, %v634
        %v636 = vpop.f32.mrb[0].mxu0
        %637 = vdwg.mxu0
        %v638 = vmul.f32 %v485, 0.35355338
        %v639 = vlaneseq
        %v640 = vshrl.u32 %v639, 7
        %v641 = vlaneseq
        %v642 = vand.u32 %v641, 127
        %vm643 = vcmp.gt.s32.totalorder %v642, %v640
        %vm644 = vcmask 64512
        %v646 = vsel %vm644, %v638, 0
        %v649 = vsel %vm644, %v560, 0
        %651 = vmatprep.subr.mxu0 0.0
        %652 = vmatpush1.xpose.msra.mxu0 %v649
        %653 = vmatprep.subr.mxu0 0.0
        %654 = vmatpush1.xpose.msra.mxu0 0.0
        %655 = vmatprep.subr.mxu0 0.0
        %656 = vmatpush1.xpose.msra.mxu0 0.0
        %657 = vmatprep.subr.mxu0 0.0
        %658 = vmatpush1.xpose.msra.mxu0 0.0
        %659 = vmatprep.subr.mxu0 0.0
        %660 = vmatpush1.xpose.msra.mxu0 0.0
        %661 = vmatprep.subr.mxu0 0.0
        %662 = vmatpush1.xpose.msra.mxu0 0.0
        %663 = vmatprep.subr.mxu0 0.0
        %664 = vmatpush1.xpose.msra.mxu0 0.0
        %665 = vmatprep.subr.mxu0 0.0
        %666 = vmatpush1.xpose.msra.mxu0 0.0
        %667 = vmatprep.subr.mxu0 0.0
        %668 = vmatpush1.xpose.msra.mxu0 0.0
        %669 = vmatprep.subr.mxu0 0.0
        %670 = vmatpush1.xpose.msra.mxu0 0.0
        %671 = vmatprep.subr.mxu0 0.0
        %672 = vmatpush1.xpose.msra.mxu0 0.0
        %673 = vmatprep.subr.mxu0 0.0
        %674 = vmatpush1.xpose.msra.mxu0 0.0
        %675 = vmatprep.subr.mxu0 0.0
        %676 = vmatpush1.xpose.msra.mxu0 0.0
        %677 = vmatprep.subr.mxu0 0.0
        %678 = vmatpush1.xpose.msra.mxu0 0.0
        %679 = vmatprep.subr.mxu0 0.0
        %680 = vmatpush1.xpose.msra.mxu0 0.0
        %681 = vmatprep.subr.mxu0 0.0
        %682 = vmatpush1.xpose.msra.mxu0 0.0
        %683 = vmatprep.subr.mxu0 0.0
        %684 = vmatpush1.xpose.msra.mxu0 0.0
        %685 = vmatprep.subr.mxu0 0.0
        %686 = vmatpush1.xpose.msra.mxu0 0.0
        %687 = vmatprep.subr.mxu0 0.0
        %688 = vmatpush1.xpose.msra.mxu0 0.0
        %689 = vmatprep.subr.mxu0 0.0
        %690 = vmatpush1.xpose.msra.mxu0 0.0
        %691 = vmatprep.subr.mxu0 0.0
        %692 = vmatpush1.xpose.msra.mxu0 0.0
        %693 = vmatprep.subr.mxu0 0.0
        %694 = vmatpush1.xpose.msra.mxu0 0.0
        %695 = vmatprep.subr.mxu0 0.0
        %696 = vmatpush1.xpose.msra.mxu0 0.0
        %697 = vmatprep.subr.mxu0 0.0
        %698 = vmatpush1.xpose.msra.mxu0 0.0
        %699 = vmatprep.subr.mxu0 0.0
        %700 = vmatpush1.xpose.msra.mxu0 0.0
        %701 = vmatprep.subr.mxu0 0.0
        %702 = vmatpush1.xpose.msra.mxu0 0.0
        %703 = vmatprep.subr.mxu0 0.0
        %704 = vmatpush1.xpose.msra.mxu0 0.0
        %705 = vmatprep.subr.mxu0 0.0
        %706 = vmatpush1.xpose.msra.mxu0 0.0
        %707 = vmatprep.subr.mxu0 0.0
        %708 = vmatpush1.xpose.msra.mxu0 0.0
        %709 = vmatprep.subr.mxu0 0.0
        %710 = vmatpush1.xpose.msra.mxu0 0.0
        %711 = vmatprep.subr.mxu0 0.0
        %712 = vmatpush1.xpose.msra.mxu0 0.0
        %713 = vmatprep.subr.mxu0 0.0
        %714 = vmatpush1.xpose.msra.mxu0 0.0
        %715 = vmatprep.mubr.f32.mxu0 0.0
        %716 = vmatmul.mubr.f32.gmra.mrb[0].mxu0 %v646
        %v717 = vpop.f32.mrb[0].mxu0
        %v718 = vadd.f32 0.0, %v717
        %v719 = vpop.f32.mrb[0].mxu0
        %720 = vdwg.mxu0
        %v721 = vsel %vm643, -inf, %v718
        %v722 = vsel %vm644, %v721, -inf
        %723 = vmax.xlane.f32.xlu0 %v722
        %v724 = vpop.xlane.xlu0 %723
        %v725 = vsub.f32 %v721, %v724
        %v726 = vmul.f32 %v725, 1.442695
        %v727 = vpow.pop %v726
        %v728 = vsel %vm644, %v727, 0.0
        %729 = vadd.xlane.f32.xlu0 %v728
        %v730 = vpop.xlane.xlu0 %729
        %v731 = vrcp.pop %v730
        %v732 = vmul.f32 %v727, %v731
        %v734 = vsel %vm644, %v732, 0
        %736 = vmatprep.subr.mxu0 0.0
        %737 = vmatpush1.msra.mxu0 %v635
        %738 = vmatprep.subr.mxu0 0.0
        %739 = vmatpush1.msra.mxu0 0.0
        %740 = vmatprep.subr.mxu0 0.0
        %741 = vmatpush1.msra.mxu0 0.0
        %742 = vmatprep.subr.mxu0 0.0
        %743 = vmatpush1.msra.mxu0 0.0
        %744 = vmatprep.subr.mxu0 0.0
        %745 = vmatpush1.msra.mxu0 0.0
        %746 = vmatprep.subr.mxu0 0.0
        %747 = vmatpush1.msra.mxu0 0.0
        %748 = vmatprep.subr.mxu0 0.0
        %749 = vmatpush1.msra.mxu0 0.0
        %750 = vmatprep.subr.mxu0 0.0
        %751 = vmatpush1.msra.mxu0 0.0
        %752 = vmatprep.subr.mxu0 0.0
        %753 = vmatpush1.msra.mxu0 0.0
        %754 = vmatprep.subr.mxu0 0.0
        %755 = vmatpush1.msra.mxu0 0.0
        %756 = vmatprep.subr.mxu0 0.0
        %757 = vmatpush1.msra.mxu0 0.0
        %758 = vmatprep.subr.mxu0 0.0
        %759 = vmatpush1.msra.mxu0 0.0
        %760 = vmatprep.subr.mxu0 0.0
        %761 = vmatpush1.msra.mxu0 0.0
        %762 = vmatprep.subr.mxu0 0.0
        %763 = vmatpush1.msra.mxu0 0.0
        %764 = vmatprep.subr.mxu0 0.0
        %765 = vmatpush1.msra.mxu0 0.0
        %766 = vmatprep.subr.mxu0 0.0
        %767 = vmatpush1.msra.mxu0 0.0
        %768 = vmatprep.subr.mxu0 0.0
        %769 = vmatpush1.msra.mxu0 0.0
        %770 = vmatprep.subr.mxu0 0.0
        %771 = vmatpush1.msra.mxu0 0.0
        %772 = vmatprep.subr.mxu0 0.0
        %773 = vmatpush1.msra.mxu0 0.0
        %774 = vmatprep.subr.mxu0 0.0
        %775 = vmatpush1.msra.mxu0 0.0
        %776 = vmatprep.subr.mxu0 0.0
        %777 = vmatpush1.msra.mxu0 0.0
        %778 = vmatprep.subr.mxu0 0.0
        %779 = vmatpush1.msra.mxu0 0.0
        %780 = vmatprep.subr.mxu0 0.0
        %781 = vmatpush1.msra.mxu0 0.0
        %782 = vmatprep.subr.mxu0 0.0
        %783 = vmatpush1.msra.mxu0 0.0
        %784 = vmatprep.subr.mxu0 0.0
        %785 = vmatpush1.msra.mxu0 0.0
        %786 = vmatprep.subr.mxu0 0.0
        %787 = vmatpush1.msra.mxu0 0.0
        %788 = vmatprep.subr.mxu0 0.0
        %789 = vmatpush1.msra.mxu0 0.0
        %790 = vmatprep.subr.mxu0 0.0
        %791 = vmatpush1.msra.mxu0 0.0
        %792 = vmatprep.subr.mxu0 0.0
        %793 = vmatpush1.msra.mxu0 0.0
        %794 = vmatprep.subr.mxu0 0.0
        %795 = vmatpush1.msra.mxu0 0.0
        %796 = vmatprep.subr.mxu0 0.0
        %797 = vmatpush1.msra.mxu0 0.0
        %798 = vmatprep.subr.mxu0 0.0
        %799 = vmatpush1.msra.mxu0 0.0
        %800 = vmatprep.mubr.f32.mxu0 0.0
        %801 = vmatmul.mubr.f32.gmra.mrb[0].mxu0 %v734
        %v802 = vpop.f32.mrb[0].mxu0
        %v803 = vadd.f32 0.0, %v802
        %v804 = vpop.f32.mrb[0].mxu0
        %805 = vdwg.mxu0
        %806 = vrot.lane.b32.xlu0 %v638, 120
        %v807 = vpop.permute.xlu0 %806
        %808 = vrot.lane.b32.xlu0 %v560, 120
        %v809 = vpop.permute.xlu0 %808
        %v810 = vsel %vm644, %v807, 0
        %v812 = vsel %vm644, %v809, 0
        %814 = vmatprep.subr.mxu0 0.0
        %815 = vmatpush1.xpose.msra.mxu0 %v812
        %816 = vmatprep.subr.mxu0 0.0
        %817 = vmatpush1.xpose.msra.mxu0 0.0
        %818 = vmatprep.subr.mxu0 0.0
        %819 = vmatpush1.xpose.msra.mxu0 0.0
        %820 = vmatprep.subr.mxu0 0.0
        %821 = vmatpush1.xpose.msra.mxu0 0.0
        %822 = vmatprep.subr.mxu0 0.0
        %823 = vmatpush1.xpose.msra.mxu0 0.0
        %824 = vmatprep.subr.mxu0 0.0
        %825 = vmatpush1.xpose.msra.mxu0 0.0
        %826 = vmatprep.subr.mxu0 0.0
        %827 = vmatpush1.xpose.msra.mxu0 0.0
        %828 = vmatprep.subr.mxu0 0.0
        %829 = vmatpush1.xpose.msra.mxu0 0.0
        %830 = vmatprep.subr.mxu0 0.0
        %831 = vmatpush1.xpose.msra.mxu0 0.0
        %832 = vmatprep.subr.mxu0 0.0
        %833 = vmatpush1.xpose.msra.mxu0 0.0
        %834 = vmatprep.subr.mxu0 0.0
        %835 = vmatpush1.xpose.msra.mxu0 0.0
        %836 = vmatprep.subr.mxu0 0.0
        %837 = vmatpush1.xpose.msra.mxu0 0.0
        %838 = vmatprep.subr.mxu0 0.0
        %839 = vmatpush1.xpose.msra.mxu0 0.0
        %840 = vmatprep.subr.mxu0 0.0
        %841 = vmatpush1.xpose.msra.mxu0 0.0
        %842 = vmatprep.subr.mxu0 0.0
        %843 = vmatpush1.xpose.msra.mxu0 0.0
        %844 = vmatprep.subr.mxu0 0.0
        %845 = vmatpush1.xpose.msra.mxu0 0.0
        %846 = vmatprep.subr.mxu0 0.0
        %847 = vmatpush1.xpose.msra.mxu0 0.0
        %848 = vmatprep.subr.mxu0 0.0
        %849 = vmatpush1.xpose.msra.mxu0 0.0
        %850 = vmatprep.subr.mxu0 0.0
        %851 = vmatpush1.xpose.msra.mxu0 0.0
        %852 = vmatprep.subr.mxu0 0.0
        %853 = vmatpush1.xpose.msra.mxu0 0.0
        %854 = vmatprep.subr.mxu0 0.0
        %855 = vmatpush1.xpose.msra.mxu0 0.0
        %856 = vmatprep.subr.mxu0 0.0
        %857 = vmatpush1.xpose.msra.mxu0 0.0
        %858 = vmatprep.subr.mxu0 0.0
        %859 = vmatpush1.xpose.msra.mxu0 0.0
        %860 = vmatprep.subr.mxu0 0.0
        %861 = vmatpush1.xpose.msra.mxu0 0.0
        %862 = vmatprep.subr.mxu0 0.0
        %863 = vmatpush1.xpose.msra.mxu0 0.0
        %864 = vmatprep.subr.mxu0 0.0
        %865 = vmatpush1.xpose.msra.mxu0 0.0
        %866 = vmatprep.subr.mxu0 0.0
        %867 = vmatpush1.xpose.msra.mxu0 0.0
        %868 = vmatprep.subr.mxu0 0.0
        %869 = vmatpush1.xpose.msra.mxu0 0.0
        %870 = vmatprep.subr.mxu0 0.0
        %871 = vmatpush1.xpose.msra.mxu0 0.0
        %872 = vmatprep.subr.mxu0 0.0
        %873 = vmatpush1.xpose.msra.mxu0 0.0
        %874 = vmatprep.subr.mxu0 0.0
        %875 = vmatpush1.xpose.msra.mxu0 0.0
        %876 = vmatprep.subr.mxu0 0.0
        %877 = vmatpush1.xpose.msra.mxu0 0.0
        %878 = vmatprep.mubr.f32.mxu0 0.0
        %879 = vmatmul.mubr.f32.gmra.mrb[0].mxu0 %v810
        %v880 = vpop.f32.mrb[0].mxu0
        %v881 = vadd.f32 0.0, %v880
        %v882 = vpop.f32.mrb[0].mxu0
        %883 = vdwg.mxu0
        %v884 = vsel %vm643, -inf, %v881
        %v885 = vsel %vm644, %v884, -inf
        %886 = vmax.xlane.f32.xlu0 %v885
        %v887 = vpop.xlane.xlu0 %886
        %v888 = vsub.f32 %v884, %v887
        %v889 = vmul.f32 %v888, 1.442695
        %v890 = vpow.pop %v889
        %v891 = vsel %vm644, %v890, 0.0
        %892 = vadd.xlane.f32.xlu0 %v891
        %v893 = vpop.xlane.xlu0 %892
        %v894 = vrcp.pop %v893
        %v895 = vmul.f32 %v890, %v894
        %897 = vrot.lane.b32.xlu0 %v635, 120
        %v898 = vpop.permute.xlu0 %897
        %v901 = vsel %vm644, %v895, 0
        %903 = vmatprep.subr.mxu0 0.0
        %904 = vmatpush1.msra.mxu0 %v898
        %905 = vmatprep.subr.mxu0 0.0
        %906 = vmatpush1.msra.mxu0 0.0
        %907 = vmatprep.subr.mxu0 0.0
        %908 = vmatpush1.msra.mxu0 0.0
        %909 = vmatprep.subr.mxu0 0.0
        %910 = vmatpush1.msra.mxu0 0.0
        %911 = vmatprep.subr.mxu0 0.0
        %912 = vmatpush1.msra.mxu0 0.0
        %913 = vmatprep.subr.mxu0 0.0
        %914 = vmatpush1.msra.mxu0 0.0
        %915 = vmatprep.subr.mxu0 0.0
        %916 = vmatpush1.msra.mxu0 0.0
        %917 = vmatprep.subr.mxu0 0.0
        %918 = vmatpush1.msra.mxu0 0.0
        %919 = vmatprep.subr.mxu0 0.0
        %920 = vmatpush1.msra.mxu0 0.0
        %921 = vmatprep.subr.mxu0 0.0
        %922 = vmatpush1.msra.mxu0 0.0
        %923 = vmatprep.subr.mxu0 0.0
        %924 = vmatpush1.msra.mxu0 0.0
        %925 = vmatprep.subr.mxu0 0.0
        %926 = vmatpush1.msra.mxu0 0.0
        %927 = vmatprep.subr.mxu0 0.0
        %928 = vmatpush1.msra.mxu0 0.0
        %929 = vmatprep.subr.mxu0 0.0
        %930 = vmatpush1.msra.mxu0 0.0
        %931 = vmatprep.subr.mxu0 0.0
        %932 = vmatpush1.msra.mxu0 0.0
        %933 = vmatprep.subr.mxu0 0.0
        %934 = vmatpush1.msra.mxu0 0.0
        %935 = vmatprep.subr.mxu0 0.0
        %936 = vmatpush1.msra.mxu0 0.0
        %937 = vmatprep.subr.mxu0 0.0
        %938 = vmatpush1.msra.mxu0 0.0
        %939 = vmatprep.subr.mxu0 0.0
        %940 = vmatpush1.msra.mxu0 0.0
        %941 = vmatprep.subr.mxu0 0.0
        %942 = vmatpush1.msra.mxu0 0.0
        %943 = vmatprep.subr.mxu0 0.0
        %944 = vmatpush1.msra.mxu0 0.0
        %945 = vmatprep.subr.mxu0 0.0
        %946 = vmatpush1.msra.mxu0 0.0
        %947 = vmatprep.subr.mxu0 0.0
        %948 = vmatpush1.msra.mxu0 0.0
        %949 = vmatprep.subr.mxu0 0.0
        %950 = vmatpush1.msra.mxu0 0.0
        %951 = vmatprep.subr.mxu0 0.0
        %952 = vmatpush1.msra.mxu0 0.0
        %953 = vmatprep.subr.mxu0 0.0
        %954 = vmatpush1.msra.mxu0 0.0
        %955 = vmatprep.subr.mxu0 0.0
        %956 = vmatpush1.msra.mxu0 0.0
        %957 = vmatprep.subr.mxu0 0.0
        %958 = vmatpush1.msra.mxu0 0.0
        %959 = vmatprep.subr.mxu0 0.0
        %960 = vmatpush1.msra.mxu0 0.0
        %961 = vmatprep.subr.mxu0 0.0
        %962 = vmatpush1.msra.mxu0 0.0
        %963 = vmatprep.subr.mxu0 0.0
        %964 = vmatpush1.msra.mxu0 0.0
        %965 = vmatprep.subr.mxu0 0.0
        %966 = vmatpush1.msra.mxu0 0.0
        %967 = vmatprep.mubr.f32.mxu0 0.0
        %968 = vmatmul.mubr.f32.gmra.mrb[0].mxu0 %v901
        %v969 = vpop.f32.mrb[0].mxu0
        %v970 = vadd.f32 0.0, %v969
        %v971 = vpop.f32.mrb[0].mxu0
        %972 = vdwg.mxu0
        %973 = vrot.lane.b32.xlu0 %v638, 112
        %v974 = vpop.permute.xlu0 %973
        %975 = vrot.lane.b32.xlu0 %v560, 112
        %v976 = vpop.permute.xlu0 %975
        %v977 = vsel %vm644, %v974, 0
        %v979 = vsel %vm644, %v976, 0
        %981 = vmatprep.subr.mxu0 0.0
        %982 = vmatpush1.xpose.msra.mxu0 %v979
        %983 = vmatprep.subr.mxu0 0.0
        %984 = vmatpush1.xpose.msra.mxu0 0.0
        %985 = vmatprep.subr.mxu0 0.0
        %986 = vmatpush1.xpose.msra.mxu0 0.0
        %987 = vmatprep.subr.mxu0 0.0
        %988 = vmatpush1.xpose.msra.mxu0 0.0
        %989 = vmatprep.subr.mxu0 0.0
        %990 = vmatpush1.xpose.msra.mxu0 0.0
        %991 = vmatprep.subr.mxu0 0.0
        %992 = vmatpush1.xpose.msra.mxu0 0.0
        %993 = vmatprep.subr.mxu0 0.0
        %994 = vmatpush1.xpose.msra.mxu0 0.0
        %995 = vmatprep.subr.mxu0 0.0
        %996 = vmatpush1.xpose.msra.mxu0 0.0
        %997 = vmatprep.subr.mxu0 0.0
        %998 = vmatpush1.xpose.msra.mxu0 0.0
        %999 = vmatprep.subr.mxu0 0.0
        %1000 = vmatpush1.xpose.msra.mxu0 0.0
        %1001 = vmatprep.subr.mxu0 0.0
        %1002 = vmatpush1.xpose.msra.mxu0 0.0
        %1003 = vmatprep.subr.mxu0 0.0
        %1004 = vmatpush1.xpose.msra.mxu0 0.0
        %1005 = vmatprep.subr.mxu0 0.0
        %1006 = vmatpush1.xpose.msra.mxu0 0.0
        %1007 = vmatprep.subr.mxu0 0.0
        %1008 = vmatpush1.xpose.msra.mxu0 0.0
        %1009 = vmatprep.subr.mxu0 0.0
        %1010 = vmatpush1.xpose.msra.mxu0 0.0
        %1011 = vmatprep.subr.mxu0 0.0
        %1012 = vmatpush1.xpose.msra.mxu0 0.0
        %1013 = vmatprep.subr.mxu0 0.0
        %1014 = vmatpush1.xpose.msra.mxu0 0.0
        %1015 = vmatprep.subr.mxu0 0.0
        %1016 = vmatpush1.xpose.msra.mxu0 0.0
        %1017 = vmatprep.subr.mxu0 0.0
        %1018 = vmatpush1.xpose.msra.mxu0 0.0
        %1019 = vmatprep.subr.mxu0 0.0
        %1020 = vmatpush1.xpose.msra.mxu0 0.0
        %1021 = vmatprep.subr.mxu0 0.0
        %1022 = vmatpush1.xpose.msra.mxu0 0.0
        %1023 = vmatprep.subr.mxu0 0.0
        %1024 = vmatpush1.xpose.msra.mxu0 0.0
        %1025 = vmatprep.subr.mxu0 0.0
        %1026 = vmatpush1.xpose.msra.mxu0 0.0
        %1027 = vmatprep.subr.mxu0 0.0
        %1028 = vmatpush1.xpose.msra.mxu0 0.0
        %1029 = vmatprep.subr.mxu0 0.0
        %1030 = vmatpush1.xpose.msra.mxu0 0.0
        %1031 = vmatprep.subr.mxu0 0.0
        %1032 = vmatpush1.xpose.msra.mxu0 0.0
        %1033 = vmatprep.subr.mxu0 0.0
        %1034 = vmatpush1.xpose.msra.mxu0 0.0
        %1035 = vmatprep.subr.mxu0 0.0
        %1036 = vmatpush1.xpose.msra.mxu0 0.0
        %1037 = vmatprep.subr.mxu0 0.0
        %1038 = vmatpush1.xpose.msra.mxu0 0.0
        %1039 = vmatprep.subr.mxu0 0.0
        %1040 = vmatpush1.xpose.msra.mxu0 0.0
        %1041 = vmatprep.subr.mxu0 0.0
        %1042 = vmatpush1.xpose.msra.mxu0 0.0
        %1043 = vmatprep.subr.mxu0 0.0
        %1044 = vmatpush1.xpose.msra.mxu0 0.0
        %1045 = vmatprep.mubr.f32.mxu0 0.0
        %1046 = vmatmul.mubr.f32.gmra.mrb[0].mxu0 %v977
        %v1047 = vpop.f32.mrb[0].mxu0
        %v1048 = vadd.f32 0.0, %v1047
        %v1049 = vpop.f32.mrb[0].mxu0
        %1050 = vdwg.mxu0
        %v1051 = vsel %vm643, -inf, %v1048
        %v1052 = vsel %vm644, %v1051, -inf
        %1053 = vmax.xlane.f32.xlu0 %v1052
        %v1054 = vpop.xlane.xlu0 %1053
        %v1055 = vsub.f32 %v1051, %v1054
        %v1056 = vmul.f32 %v1055, 1.442695
        %v1057 = vpow.pop %v1056
        %v1058 = vsel %vm644, %v1057, 0.0
        %1059 = vadd.xlane.f32.xlu0 %v1058
        %v1060 = vpop.xlane.xlu0 %1059
        %v1061 = vrcp.pop %v1060
        %v1062 = vmul.f32 %v1057, %v1061
        %1063 = vrot.lane.b32.xlu0 %v635, 112
        %v1064 = vpop.permute.xlu0 %1063
        %v1067 = vsel %vm644, %v1062, 0
        %1069 = vmatprep.subr.mxu0 0.0
        %1070 = vmatpush1.msra.mxu0 %v1064
        %1071 = vmatprep.subr.mxu0 0.0
        %1072 = vmatpush1.msra.mxu0 0.0
        %1073 = vmatprep.subr.mxu0 0.0
        %1074 = vmatpush1.msra.mxu0 0.0
        %1075 = vmatprep.subr.mxu0 0.0
        %1076 = vmatpush1.msra.mxu0 0.0
        %1077 = vmatprep.subr.mxu0 0.0
        %1078 = vmatpush1.msra.mxu0 0.0
        %1079 = vmatprep.subr.mxu0 0.0
        %1080 = vmatpush1.msra.mxu0 0.0
        %1081 = vmatprep.subr.mxu0 0.0
        %1082 = vmatpush1.msra.mxu0 0.0
        %1083 = vmatprep.subr.mxu0 0.0
        %1084 = vmatpush1.msra.mxu0 0.0
        %1085 = vmatprep.subr.mxu0 0.0
        %1086 = vmatpush1.msra.mxu0 0.0
        %1087 = vmatprep.subr.mxu0 0.0
        %1088 = vmatpush1.msra.mxu0 0.0
        %1089 = vmatprep.subr.mxu0 0.0
        %1090 = vmatpush1.msra.mxu0 0.0
        %1091 = vmatprep.subr.mxu0 0.0
        %1092 = vmatpush1.msra.mxu0 0.0
        %1093 = vmatprep.subr.mxu0 0.0
        %1094 = vmatpush1.msra.mxu0 0.0
        %1095 = vmatprep.subr.mxu0 0.0
        %1096 = vmatpush1.msra.mxu0 0.0
        %1097 = vmatprep.subr.mxu0 0.0
        %1098 = vmatpush1.msra.mxu0 0.0
        %1099 = vmatprep.subr.mxu0 0.0
        %1100 = vmatpush1.msra.mxu0 0.0
        %1101 = vmatprep.subr.mxu0 0.0
        %1102 = vmatpush1.msra.mxu0 0.0
        %1103 = vmatprep.subr.mxu0 0.0
        %1104 = vmatpush1.msra.mxu0 0.0
        %1105 = vmatprep.subr.mxu0 0.0
        %1106 = vmatpush1.msra.mxu0 0.0
        %1107 = vmatprep.subr.mxu0 0.0
        %1108 = vmatpush1.msra.mxu0 0.0
        %1109 = vmatprep.subr.mxu0 0.0
        %1110 = vmatpush1.msra.mxu0 0.0
        %1111 = vmatprep.subr.mxu0 0.0
        %1112 = vmatpush1.msra.mxu0 0.0
        %1113 = vmatprep.subr.mxu0 0.0
        %1114 = vmatpush1.msra.mxu0 0.0
        %1115 = vmatprep.subr.mxu0 0.0
        %1116 = vmatpush1.msra.mxu0 0.0
        %1117 = vmatprep.subr.mxu0 0.0
        %1118 = vmatpush1.msra.mxu0 0.0
        %1119 = vmatprep.subr.mxu0 0.0
        %1120 = vmatpush1.msra.mxu0 0.0
        %1121 = vmatprep.subr.mxu0 0.0
        %1122 = vmatpush1.msra.mxu0 0.0
        %1123 = vmatprep.subr.mxu0 0.0
        %1124 = vmatpush1.msra.mxu0 0.0
        %1125 = vmatprep.subr.mxu0 0.0
        %1126 = vmatpush1.msra.mxu0 0.0
        %1127 = vmatprep.subr.mxu0 0.0
        %1128 = vmatpush1.msra.mxu0 0.0
        %1129 = vmatprep.subr.mxu0 0.0
        %1130 = vmatpush1.msra.mxu0 0.0
        %1131 = vmatprep.subr.mxu0 0.0
        %1132 = vmatpush1.msra.mxu0 0.0
        %1133 = vmatprep.mubr.f32.mxu0 0.0
        %1134 = vmatmul.mubr.f32.gmra.mrb[0].mxu0 %v1067
        %v1135 = vpop.f32.mrb[0].mxu0
        %v1136 = vadd.f32 0.0, %v1135
        %v1137 = vpop.f32.mrb[0].mxu0
        %1138 = vdwg.mxu0
        %1139 = vrot.lane.b32.xlu0 %v638, 104
        %v1140 = vpop.permute.xlu0 %1139
        %1141 = vrot.lane.b32.xlu0 %v560, 104
        %v1142 = vpop.permute.xlu0 %1141
        %v1143 = vsel %vm644, %v1140, 0
        %v1145 = vsel %vm644, %v1142, 0
        %1147 = vmatprep.subr.mxu0 0.0
        %1148 = vmatpush1.xpose.msra.mxu0 %v1145
        %1149 = vmatprep.subr.mxu0 0.0
        %1150 = vmatpush1.xpose.msra.mxu0 0.0
        %1151 = vmatprep.subr.mxu0 0.0
        %1152 = vmatpush1.xpose.msra.mxu0 0.0
        %1153 = vmatprep.subr.mxu0 0.0
        %1154 = vmatpush1.xpose.msra.mxu0 0.0
        %1155 = vmatprep.subr.mxu0 0.0
        %1156 = vmatpush1.xpose.msra.mxu0 0.0
        %1157 = vmatprep.subr.mxu0 0.0
        %1158 = vmatpush1.xpose.msra.mxu0 0.0
        %1159 = vmatprep.subr.mxu0 0.0
        %1160 = vmatpush1.xpose.msra.mxu0 0.0
        %1161 = vmatprep.subr.mxu0 0.0
        %1162 = vmatpush1.xpose.msra.mxu0 0.0
        %1163 = vmatprep.subr.mxu0 0.0
        %1164 = vmatpush1.xpose.msra.mxu0 0.0
        %1165 = vmatprep.subr.mxu0 0.0
        %1166 = vmatpush1.xpose.msra.mxu0 0.0
        %1167 = vmatprep.subr.mxu0 0.0
        %1168 = vmatpush1.xpose.msra.mxu0 0.0
        %1169 = vmatprep.subr.mxu0 0.0
        %1170 = vmatpush1.xpose.msra.mxu0 0.0
        %1171 = vmatprep.subr.mxu0 0.0
        %1172 = vmatpush1.xpose.msra.mxu0 0.0
        %1173 = vmatprep.subr.mxu0 0.0
        %1174 = vmatpush1.xpose.msra.mxu0 0.0
        %1175 = vmatprep.subr.mxu0 0.0
        %1176 = vmatpush1.xpose.msra.mxu0 0.0
        %1177 = vmatprep.subr.mxu0 0.0
        %1178 = vmatpush1.xpose.msra.mxu0 0.0
        %1179 = vmatprep.subr.mxu0 0.0
        %1180 = vmatpush1.xpose.msra.mxu0 0.0
        %1181 = vmatprep.subr.mxu0 0.0
        %1182 = vmatpush1.xpose.msra.mxu0 0.0
        %1183 = vmatprep.subr.mxu0 0.0
        %1184 = vmatpush1.xpose.msra.mxu0 0.0
        %1185 = vmatprep.subr.mxu0 0.0
        %1186 = vmatpush1.xpose.msra.mxu0 0.0
        %1187 = vmatprep.subr.mxu0 0.0
        %1188 = vmatpush1.xpose.msra.mxu0 0.0
        %1189 = vmatprep.subr.mxu0 0.0
        %1190 = vmatpush1.xpose.msra.mxu0 0.0
        %1191 = vmatprep.subr.mxu0 0.0
        %1192 = vmatpush1.xpose.msra.mxu0 0.0
        %1193 = vmatprep.subr.mxu0 0.0
        %1194 = vmatpush1.xpose.msra.mxu0 0.0
        %1195 = vmatprep.subr.mxu0 0.0
        %1196 = vmatpush1.xpose.msra.mxu0 0.0
        %1197 = vmatprep.subr.mxu0 0.0
        %1198 = vmatpush1.xpose.msra.mxu0 0.0
        %1199 = vmatprep.subr.mxu0 0.0
        %1200 = vmatpush1.xpose.msra.mxu0 0.0
        %1201 = vmatprep.subr.mxu0 0.0
        %1202 = vmatpush1.xpose.msra.mxu0 0.0
        %1203 = vmatprep.subr.mxu0 0.0
        %1204 = vmatpush1.xpose.msra.mxu0 0.0
        %1205 = vmatprep.subr.mxu0 0.0
        %1206 = vmatpush1.xpose.msra.mxu0 0.0
        %1207 = vmatprep.subr.mxu0 0.0
        %1208 = vmatpush1.xpose.msra.mxu0 0.0
        %1209 = vmatprep.subr.mxu0 0.0
        %1210 = vmatpush1.xpose.msra.mxu0 0.0
        %1211 = vmatprep.mubr.f32.mxu0 0.0
        %1212 = vmatmul.mubr.f32.gmra.mrb[0].mxu0 %v1143
        %v1213 = vpop.f32.mrb[0].mxu0
        %v1214 = vadd.f32 0.0, %v1213
        %v1215 = vpop.f32.mrb[0].mxu0
        %1216 = vdwg.mxu0
        %v1217 = vsel %vm643, -inf, %v1214
        %v1218 = vsel %vm644, %v1217, -inf
        %1219 = vmax.xlane.f32.xlu0 %v1218
        %v1220 = vpop.xlane.xlu0 %1219
        %v1221 = vsub.f32 %v1217, %v1220
        %v1222 = vmul.f32 %v1221, 1.442695
        %v1223 = vpow.pop %v1222
        %v1224 = vsel %vm644, %v1223, 0.0
        %1225 = vadd.xlane.f32.xlu0 %v1224
        %v1226 = vpop.xlane.xlu0 %1225
        %v1227 = vrcp.pop %v1226
        %v1228 = vmul.f32 %v1223, %v1227
        %1229 = vrot.lane.b32.xlu0 %v635, 104
        %v1230 = vpop.permute.xlu0 %1229
        %v1233 = vsel %vm644, %v1228, 0
        %1235 = vmatprep.subr.mxu0 0.0
        %1236 = vmatpush1.msra.mxu0 %v1230
        %1237 = vmatprep.subr.mxu0 0.0
        %1238 = vmatpush1.msra.mxu0 0.0
        %1239 = vmatprep.subr.mxu0 0.0
        %1240 = vmatpush1.msra.mxu0 0.0
        %1241 = vmatprep.subr.mxu0 0.0
        %1242 = vmatpush1.msra.mxu0 0.0
        %1243 = vmatprep.subr.mxu0 0.0
        %1244 = vmatpush1.msra.mxu0 0.0
        %1245 = vmatprep.subr.mxu0 0.0
        %1246 = vmatpush1.msra.mxu0 0.0
        %1247 = vmatprep.subr.mxu0 0.0
        %1248 = vmatpush1.msra.mxu0 0.0
        %1249 = vmatprep.subr.mxu0 0.0
        %1250 = vmatpush1.msra.mxu0 0.0
        %1251 = vmatprep.subr.mxu0 0.0
        %1252 = vmatpush1.msra.mxu0 0.0
        %1253 = vmatprep.subr.mxu0 0.0
        %1254 = vmatpush1.msra.mxu0 0.0
        %1255 = vmatprep.subr.mxu0 0.0
        %1256 = vmatpush1.msra.mxu0 0.0
        %1257 = vmatprep.subr.mxu0 0.0
        %1258 = vmatpush1.msra.mxu0 0.0
        %1259 = vmatprep.subr.mxu0 0.0
        %1260 = vmatpush1.msra.mxu0 0.0
        %1261 = vmatprep.subr.mxu0 0.0
        %1262 = vmatpush1.msra.mxu0 0.0
        %1263 = vmatprep.subr.mxu0 0.0
        %1264 = vmatpush1.msra.mxu0 0.0
        %1265 = vmatprep.subr.mxu0 0.0
        %1266 = vmatpush1.msra.mxu0 0.0
        %1267 = vmatprep.subr.mxu0 0.0
        %1268 = vmatpush1.msra.mxu0 0.0
        %1269 = vmatprep.subr.mxu0 0.0
        %1270 = vmatpush1.msra.mxu0 0.0
        %1271 = vmatprep.subr.mxu0 0.0
        %1272 = vmatpush1.msra.mxu0 0.0
        %1273 = vmatprep.subr.mxu0 0.0
        %1274 = vmatpush1.msra.mxu0 0.0
        %1275 = vmatprep.subr.mxu0 0.0
        %1276 = vmatpush1.msra.mxu0 0.0
        %1277 = vmatprep.subr.mxu0 0.0
        %1278 = vmatpush1.msra.mxu0 0.0
        %1279 = vmatprep.subr.mxu0 0.0
        %1280 = vmatpush1.msra.mxu0 0.0
        %1281 = vmatprep.subr.mxu0 0.0
        %1282 = vmatpush1.msra.mxu0 0.0
        %1283 = vmatprep.subr.mxu0 0.0
        %1284 = vmatpush1.msra.mxu0 0.0
        %1285 = vmatprep.subr.mxu0 0.0
        %1286 = vmatpush1.msra.mxu0 0.0
        %1287 = vmatprep.subr.mxu0 0.0
        %1288 = vmatpush1.msra.mxu0 0.0
        %1289 = vmatprep.subr.mxu0 0.0
        %1290 = vmatpush1.msra.mxu0 0.0
        %1291 = vmatprep.subr.mxu0 0.0
        %1292 = vmatpush1.msra.mxu0 0.0
        %1293 = vmatprep.subr.mxu0 0.0
        %1294 = vmatpush1.msra.mxu0 0.0
        %1295 = vmatprep.subr.mxu0 0.0
        %1296 = vmatpush1.msra.mxu0 0.0
        %1297 = vmatprep.subr.mxu0 0.0
        %1298 = vmatpush1.msra.mxu0 0.0
        %1299 = vmatprep.mubr.f32.mxu0 0.0
        %1300 = vmatmul.mubr.f32.gmra.mrb[0].mxu0 %v1233
        %v1301 = vpop.f32.mrb[0].mxu0
        %v1302 = vadd.f32 0.0, %v1301
        %v1303 = vpop.f32.mrb[0].mxu0
        %1304 = vdwg.mxu0
        %1306 = vrot.lane.b32.xlu0 %v970, 8
        %v1307 = vpop.permute.xlu0 %1306
        %1310 = vrot.lane.b32.xlu0 %v1136, 16
        %v1311 = vpop.permute.xlu0 %1310
        %1314 = vrot.lane.b32.xlu0 %v1302, 24
        %v1315 = vpop.permute.xlu0 %1314
        %v1317 = vsel %vm644, %v803, %v1307
        %v1318 = vsel %vm414, %v1317, %v1311
        %vm1319 = vcmask 195584
        %v1320 = vsel %vm1319, %v1318, %v1315
        %v1321 = vld [vmem:[#allocation11] sm:$0xff]
        %v1322 = vld [vmem:[#allocation11 + $0x8] sm:$0xff]
        %v1323 = vld [vmem:[#allocation11 + $0x10] sm:$0xff]
        %v1324 = vld [vmem:[#allocation11 + $0x18] sm:$0xff]
        %vm1325 = vcmask 261120
        %v1327 = vsel %vm1325, %v1320, 0
        %1329 = vmatprep.subr.mxu0 0.0
        %1330 = vmatpush1.msra.mxu0 %v1321
        %1331 = vmatprep.subr.mxu0 0.0
        %1332 = vmatpush1.msra.mxu0 %v1322
        %1333 = vmatprep.subr.mxu0 0.0
        %1334 = vmatpush1.msra.mxu0 %v1323
        %1335 = vmatprep.subr.mxu0 0.0
        %1336 = vmatpush1.msra.mxu0 %v1324
        %1337 = vmatprep.subr.mxu0 0.0
        %1338 = vmatpush1.msra.mxu0 0.0
        %1339 = vmatprep.subr.mxu0 0.0
        %1340 = vmatpush1.msra.mxu0 0.0
        %1341 = vmatprep.subr.mxu0 0.0
        %1342 = vmatpush1.msra.mxu0 0.0
        %1343 = vmatprep.subr.mxu0 0.0
        %1344 = vmatpush1.msra.mxu0 0.0
        %1345 = vmatprep.subr.mxu0 0.0
        %1346 = vmatpush1.msra.mxu0 0.0
        %1347 = vmatprep.subr.mxu0 0.0
        %1348 = vmatpush1.msra.mxu0 0.0
        %1349 = vmatprep.subr.mxu0 0.0
        %1350 = vmatpush1.msra.mxu0 0.0
        %1351 = vmatprep.subr.mxu0 0.0
        %1352 = vmatpush1.msra.mxu0 0.0
        %1353 = vmatprep.subr.mxu0 0.0
        %1354 = vmatpush1.msra.mxu0 0.0
        %1355 = vmatprep.subr.mxu0 0.0
        %1356 = vmatpush1.msra.mxu0 0.0
        %1357 = vmatprep.subr.mxu0 0.0
        %1358 = vmatpush1.msra.mxu0 0.0
        %1359 = vmatprep.subr.mxu0 0.0
        %1360 = vmatpush1.msra.mxu0 0.0
        %1361 = vmatprep.subr.mxu0 0.0
        %1362 = vmatpush1.msra.mxu0 0.0
        %1363 = vmatprep.subr.mxu0 0.0
        %1364 = vmatpush1.msra.mxu0 0.0
        %1365 = vmatprep.subr.mxu0 0.0
        %1366 = vmatpush1.msra.mxu0 0.0
        %1367 = vmatprep.subr.mxu0 0.0
        %1368 = vmatpush1.msra.mxu0 0.0
        %1369 = vmatprep.subr.mxu0 0.0
        %1370 = vmatpush1.msra.mxu0 0.0
        %1371 = vmatprep.subr.mxu0 0.0
        %1372 = vmatpush1.msra.mxu0 0.0
        %1373 = vmatprep.subr.mxu0 0.0
        %1374 = vmatpush1.msra.mxu0 0.0
        %1375 = vmatprep.subr.mxu0 0.0
        %1376 = vmatpush1.msra.mxu0 0.0
        %1377 = vmatprep.subr.mxu0 0.0
        %1378 = vmatpush1.msra.mxu0 0.0
        %1379 = vmatprep.subr.mxu0 0.0
        %1380 = vmatpush1.msra.mxu0 0.0
        %1381 = vmatprep.subr.mxu0 0.0
        %1382 = vmatpush1.msra.mxu0 0.0
        %1383 = vmatprep.subr.mxu0 0.0
        %1384 = vmatpush1.msra.mxu0 0.0
        %1385 = vmatprep.subr.mxu0 0.0
        %1386 = vmatpush1.msra.mxu0 0.0
        %1387 = vmatprep.subr.mxu0 0.0
        %1388 = vmatpush1.msra.mxu0 0.0
        %1389 = vmatprep.subr.mxu0 0.0
        %1390 = vmatpush1.msra.mxu0 0.0
        %1391 = vmatprep.subr.mxu0 0.0
        %1392 = vmatpush1.msra.mxu0 0.0
        %1393 = vmatprep.mubr.f32.mxu0 0.0
        %1394 = vmatmul.mubr.f32.gmra.mrb[0].mxu0 %v1327
        %v1395 = vpop.f32.mrb[0].mxu0
        %v1396 = vadd.f32 0.0, %v1395
        %v1397 = vpop.f32.mrb[0].mxu0
        %1398 = vdwg.mxu0
        %1399 = vst.msk [vmem:[%s408] sm:$0xff] %vm1325, %v1396
        %s1400 = sand.u32 %s199, 1
        %s1401 = scalar_lea.sflag [#allocation4], %s1400
        %s1402 = sand.u32 %s199, 1
        %s1403 = smul.addr %s1402, 8
        %s1404 = scalar_lea.vmem [#allocation13], %s1403
        // Predicated region
        $region73: #{tpu_custom_call.1} parent=47 // pred_check
          %p1405 = pneg %p209
        $region74: #{tpu_custom_call.1} parent=47 // pred_check_branch
          %1407 = sbr.rel (%p1405) target = $region76
        $region75: #{tpu_custom_call.1} parent=47 // pred_region
          %s1409 = ssub.s32 128, 128
          %1410 = vsyncadd %s1401, %s1409
          %s1411 = smul.addr %s29, 128
          %s1412 = scalar_lea.hbm %s7, %s1411
          %s1414 = sshll.u32 %s1404, 4
          %s1415 = int_to_ptr.vmem [resolvable:$true] %s1414
          %1417 = dma.vmem_to_hbm [thread:$0]  %s1415, 128, %s1412, %s1401
        $region76: #{tpu_custom_call.1} parent=47 // pred_fallthru
          _
      $region48: #{tpu_custom_call.1} parent=5 // pred_fallthru
        _
      %p1418 = scmp.le.s32.totalorder 2, %s24
      // Predicated region
      $region77: #{tpu_custom_call.1} parent=5 // pred_check
        %p1419 = pneg %p1418
      $region78: #{tpu_custom_call.1} parent=5 // pred_check_branch
        %1421 = sbr.rel (%p1419) target = $region80
      $region79: #{tpu_custom_call.1} parent=5 // pred_region
        %s1422 = ssub.s32 %s24, 2
        // Predicated region
        $region81: #{tpu_custom_call.1} parent=79 // pred_check
          %p1423 = pneg %p215
        $region82: #{tpu_custom_call.1} parent=79 // pred_check_branch
          %1425 = sbr.rel (%p1423) target = $region84
        $region83: #{tpu_custom_call.1} parent=79 // pred_region
          %s1426 = sand.u32 %s200, 1
          %s1427 = scalar_lea.sflag [#allocation4], %s1426
          %s1428 = sand.u32 %s200, 1
          %s1429 = smul.addr %s1428, 8
          %s1430 = scalar_lea.vmem [#allocation13], %s1429
          %1431 = dma.done %s1427, 128
        $region84: #{tpu_custom_call.1} parent=79 // pred_fallthru
          _
      $region80: #{tpu_custom_call.1} parent=5 // pred_fallthru
        _
    $region6: #{tpu_custom_call.1} parent=1 // loop_footer
      %s28 = sadd.s32 1, %s24
    $region7: #{tpu_custom_call.1} parent=1 // loop_footer_branch
      %23 = sbr.rel target = $region3
    $region8: #{tpu_custom_call.1} parent=1 // loop_exit
      _
    %1432 = vsyncpa [#allocation3], 1
    %s1433 = scalar_lea.sflag [#allocation3], 1
    %1434 = vsyncpa %s1433, 1
    %1435 = vsyncpa [#allocation6], 1
    %s1436 = scalar_lea.sflag [#allocation6], 1
    %1437 = vsyncpa %s1436, 1
    %1438 = vsyncpa [#allocation9], 1
    %1439 = vsyncpa [#allocation12], 1
    %1440 = vsyncpa [#allocation4], 1
    %s1441 = scalar_lea.sflag [#allocation4], 1
    %1442 = vsyncpa %s1441, 1

</llo_original>
